<compile_context>
chip_gen: v5e
topology: v5e:2x2
jax: 0.10.0
libtpu: 0.0.40
codegen_flags: <defaults>
</compile_context>

<pallas_src>
import functools
import math

import jax
import jax.numpy as jnp
from jax.experimental import pallas as pl
from jax.experimental.pallas import tpu as pltpu

PAD = 0  # padding index used by LabelSmoothingLoss


# ----------------------------------------------------------------------------
# Generation-aware tuning knobs (VMEM budget, tile sizes, batch split).
# ----------------------------------------------------------------------------
def _round_up(n, m):
    return ((n + m - 1) // m) * m


def _tpu_profile():
    """Pick tile sizes / VMEM limits from the actual chip (v5e/v6e vs v7x)."""
    vmem_cap = None
    try:
        vmem_cap = int(pltpu.get_tpu_info().vmem_capacity_bytes)
    except Exception:
        vmem_cap = None
    known = vmem_cap is not None
    if not known:
        vmem_cap = 64 * 1024 * 1024          # conservative: safe on every gen
    small_vmem = vmem_cap <= 64 * 1024 * 1024  # v7x: 64 MiB VMEM, 2 TCs/chip
    return {
        # Leave headroom for compiler scratch + double buffers.
        "vmem_limit": (48 if small_vmem else 96) * 1024 * 1024,
        "max_tchunk": 16 if small_vmem else 32,      # timesteps per grid step
        "loss_tn":    128 if small_vmem else 256,    # token tile (loss kernel)
        "vocab_tile": 1024 if small_vmem else 2048,  # vocab tile (loss kernel)
        # Batch split only pays on 2-TC chips; never split on v5e/v6e.
        "split_batch": known and small_vmem,
    }


def _const_block_spec(shape, index_map):
    """Grid-constant operand: one VMEM buffer is enough (skip double-buffering)."""
    if hasattr(pl, "Buffered"):
        try:
            return pl.BlockSpec(shape, index_map, pipeline_mode=pl.Buffered(1))
        except TypeError:
            pass
    return pl.BlockSpec(shape, index_map)


def _batch_tile(b, prof):
    # Split across TensorCores only on 2-TC chips and only when both halves
    # stay >= 16 rows (bf16 native sublane tile); otherwise keep batch whole.
    if prof["split_batch"] and b % 32 == 0:
        return b // 2
    return b


def _time_chunk(t, tb, hidden, prof):
    # Timesteps per grid step: amortize ~0.35us per-step overhead, capped so
    # the double-buffered x/y chunk blocks stay well inside the VMEM budget.
    per_step = 8 * tb * hidden                       # 2x(x)+2x(y) bf16 buffers
    cap = min(prof["max_tchunk"], max(1, (prof["vmem_limit"] // 2) // per_step))
    cap = min(cap, t)
    for c in range(cap, 0, -1):
        if t % c == 0:
            return c
    return 1


# ----------------------------------------------------------------------------
# Kernel 1: LSTM layer with fused input projection.
# grid = (batch_blocks, time_chunks); h (bf16) / c (f32) state in VMEM scratch.
# Per step: gates = x_t @ W_ih^T + b + h @ W_hh^T, then elementwise LSTM cell.
# The x-projection matmul has no dependence on the h-chain, so the scheduler
# overlaps it with the serial recurrence.
# ----------------------------------------------------------------------------
def lstm_recur_kernel(x_ref, wih_ref, whh_ref, b_ref, y_ref, h_ref, c_ref,
                      *, hidden, tchunk):
    tc = pl.program_id(1)

    @pl.when(tc == 0)   # new batch block -> reset state
    def _():
        h_ref[...] = jnp.zeros_like(h_ref)
        c_ref[...] = jnp.zeros_like(c_ref)

    H = hidden
    wih = wih_ref[...]                      # (H, 4H) bf16, VMEM resident
    whh = whh_ref[...]                      # (H, 4H) bf16, VMEM resident
    b = b_ref[...]                          # (1, 4H) f32, fused b_ih + b_hh

    h = h_ref[...]                          # (TB, H) bf16
    c = c_ref[...]                          # (TB, H) f32

    # tchunk is a small static constant -> fully unrolled at trace time.
    # TODO(synk): for production sizes keep H a multiple of 128 so the per-gate
    # slices below are lane-tile aligned (avoids per-step relayout copies).
    for s in range(tchunk):
        gates = (jnp.dot(x_ref[s], wih, preferred_element_type=jnp.float32)
                 + b
                 + jnp.dot(h, whh, preferred_element_type=jnp.float32))   # (TB, 4H)
        # Contiguous gate slabs (PyTorch gate order [i, f, g, o]):
        # TODO(synk): on v6e/v7x the EUP supports bf16 activations (~2x); kept
        # f32 here for v5e portability / tighter numerics.
        if_slab = jax.nn.sigmoid(gates[:, 0:2 * H])                       # i, f
        i_g = if_slab[:, 0:H]
        f_g = if_slab[:, H:2 * H]
        g_g = jnp.tanh(gates[:, 2 * H:3 * H])
        o_g = jax.nn.sigmoid(gates[:, 3 * H:4 * H])
        c = f_g * c + i_g * g_g                                           # f32
        h = (o_g * jnp.tanh(c)).astype(jnp.bfloat16)                      # bf16
        y_ref[s] = h

    h_ref[...] = h
    c_ref[...] = c


def lstm_recurrent(x_tbh, w_ih_t, w_hh_t, b_2d, hidden, prof):
    T, B, H = x_tbh.shape
    G4 = 4 * hidden
    TB = _batch_tile(B, prof)
    TCHUNK = _time_chunk(T, TB, hidden, prof)
    kern = functools.partial(lstm_recur_kernel, hidden=hidden, tchunk=TCHUNK)
    return pl.pallas_call(
        kern,
        out_shape=jax.ShapeDtypeStruct((T, B, H), jnp.bfloat16),
        grid_spec=pltpu.PrefetchScalarGridSpec(
            num_scalar_prefetch=0,
            grid=(B // TB, T // TCHUNK),
            in_specs=[
                pl.BlockSpec((TCHUNK, TB, H), lambda bb, tc: (tc, bb, 0)),  # x
                _const_block_spec((H, G4), lambda bb, tc: (0, 0)),          # W_ih^T
                _const_block_spec((H, G4), lambda bb, tc: (0, 0)),          # W_hh^T
                _const_block_spec((1, G4), lambda bb, tc: (0, 0)),          # bias
            ],
            out_specs=pl.BlockSpec((TCHUNK, TB, H), lambda bb, tc: (tc, bb, 0)),
            scratch_shapes=[pltpu.VMEM((TB, H), jnp.bfloat16),   # h state (bf16)
                            pltpu.VMEM((TB, H), jnp.float32)],   # c state (f32)
        ),
        compiler_params=pltpu.CompilerParams(
            # batch blocks are independent (v7x megacore); time is a recurrence.
            dimension_semantics=("parallel", "arbitrary"),
            vmem_limit_bytes=prof["vmem_limit"]),
    )(x_tbh, w_ih_t, w_hh_t, b_2d)


# ----------------------------------------------------------------------------
# Kernel 2: output projection + label-smoothing KLDiv loss, tiled over
# (token blocks, vocab blocks) with an online logsumexp over vocab tiles.
# per-token loss = sum_v q(v)*(log q(v) - log p(v)), q = smoothed one-hot;
# cross term computed directly from logits:
#   cross = eps*(sum_v logits - V*lse) + (conf-eps)*(logits[tgt] - lse)
# Rows whose target == PAD (including token-padding rows) contribute 0.
# Output is the per-token loss vector; the wrapper does the final sum.
# ----------------------------------------------------------------------------
def proj_loss_kernel(h_ref, w_ref, b_ref, tgt_ref, out_ref,
                     m_ref, s_ref, sl_ref, lt_ref, *, vocab, vtile, smoothing):
    v = pl.program_id(1)
    nv = pl.num_programs(1)

    @pl.when(v == 0)
    def _():
        m_ref[...] = jnp.full_like(m_ref, -jnp.inf)
        s_ref[...] = jnp.zeros_like(s_ref)
        sl_ref[...] = jnp.zeros_like(sl_ref)
        lt_ref[...] = jnp.zeros_like(lt_ref)

    logits = (jnp.dot(h_ref[...], w_ref[...], preferred_element_type=jnp.float32)
              + b_ref[...])                                          # (TN, VT) f32
    col = jax.lax.broadcasted_iota(jnp.int32, logits.shape, 1) + v * vtile
    valid = col < vocab                                              # vocab padding
    logits_lse = jnp.where(valid, logits, -1e30)

    # Online logsumexp over vocab tiles.
    m_prev = m_ref[...]
    m_new = jnp.maximum(m_prev, jnp.max(logits_lse, axis=-1, keepdims=True))
    s_ref[...] = (s_ref[...] * jnp.exp(m_prev - m_new)
                  + jnp.sum(jnp.exp(logits_lse - m_new), axis=-1, keepdims=True))
    m_ref[...] = m_new

    # Running sum of logits (eps term) and the target logit (confidence term).
    tgt = tgt_ref[...]                                               # (TN, 1) int32
    sl_ref[...] += jnp.sum(jnp.where(valid, logits, 0.0), axis=-1, keepdims=True)
    lt_ref[...] += jnp.sum(jnp.where(col == tgt, logits, 0.0), axis=-1, keepdims=True)

    @pl.when(v == nv - 1)
    def _():
        conf = 1.0 - smoothing
        eps = (smoothing / (vocab - 1)) if (smoothing > 0.0 and vocab > 1) else 0.0
        c_const = 0.0                      # sum_v q log q (guard log(0) cases)
        if conf > 0.0:
            c_const += conf * math.log(conf)
        if eps > 0.0:
            c_const += (vocab - 1) * eps * math.log(eps)
        lse = m_ref[...] + jnp.log(s_ref[...])                       # (TN, 1)
        cross = (eps * (sl_ref[...] - vocab * lse)
                 + (conf - eps) * (lt_ref[...] - lse))
        per_tok = c_const - cross
        out_ref[...] = jnp.where(tgt != PAD, per_tok, 0.0)


def project_and_loss(hs_flat, w_out_t, b_out, targets_flat, vocab, smoothing, prof):
    N, H = hs_flat.shape

    # Token tiling: pad N to a multiple of TN (padded rows carry PAD targets).
    TN = prof["loss_tn"]
    if N < TN:
        TN = _round_up(N, 8)
    N_pad = _round_up(N, TN)
    if N_pad != N:
        hs_flat = jnp.pad(hs_flat, ((0, N_pad - N), (0, 0)))
        targets_flat = jnp.pad(targets_flat, ((0, N_pad - N), (0, 0)),
                               constant_values=PAD)

    # Vocab tiling: stream W_out^T in (H, VT) blocks; pad + mask the tail.
    VT = prof["vocab_tile"]
    if vocab <= VT:
        VT = vocab
        V_pad = vocab
    else:
        V_pad = _round_up(vocab, VT)
        if V_pad != vocab:
            w_out_t = jnp.pad(w_out_t, ((0, 0), (0, V_pad - vocab)))
            b_out = jnp.pad(b_out, ((0, 0), (0, V_pad - vocab)))
    n_vblocks = V_pad // VT

    # Weight/bias blocks: streamed (double-buffered) when vocab is tiled,
    # single-buffered residents when there is only one vocab block.
    if n_vblocks == 1:
        w_spec = _const_block_spec((H, VT), lambda i, v: (0, 0))
        b_spec = _const_block_spec((1, VT), lambda i, v: (0, 0))
    else:
        w_spec = pl.BlockSpec((H, VT), lambda i, v: (0, v))
        b_spec = pl.BlockSpec((1, VT), lambda i, v: (0, v))

    kern = functools.partial(proj_loss_kernel, vocab=vocab, vtile=VT,
                             smoothing=smoothing)
    cost = pl.CostEstimate(
        flops=2 * N_pad * H * V_pad + 10 * N_pad * V_pad,
        transcendentals=N_pad * V_pad,
        bytes_accessed=(N_pad * H * 2 + (N_pad // TN) * H * V_pad * 2
                        + N_pad * 8))
    per_tok = pl.pallas_call(
        kern,
        out_shape=jax.ShapeDtypeStruct((N_pad, 1), jnp.float32),
        grid_spec=pltpu.PrefetchScalarGridSpec(
            num_scalar_prefetch=0,
            grid=(N_pad // TN, n_vblocks),
            in_specs=[
                pl.BlockSpec((TN, H), lambda i, v: (i, 0)),   # h tile (resident over v)
                w_spec,                                       # W_out^T tile
                b_spec,                                       # b_out tile
                pl.BlockSpec((TN, 1), lambda i, v: (i, 0)),   # targets
            ],
            out_specs=pl.BlockSpec((TN, 1), lambda i, v: (i, 0)),
            scratch_shapes=[pltpu.VMEM((TN, 1), jnp.float32),   # running max
                            pltpu.VMEM((TN, 1), jnp.float32),   # running sum-exp
                            pltpu.VMEM((TN, 1), jnp.float32),   # sum of logits
                            pltpu.VMEM((TN, 1), jnp.float32)],  # target logit
        ),
        compiler_params=pltpu.CompilerParams(
            # Token blocks are independent (megacore); vocab is the reduction.
            dimension_semantics=("parallel", "arbitrary"),
            vmem_limit_bytes=prof["vmem_limit"]),
        cost_estimate=cost,
    )(hs_flat, w_out_t, b_out, targets_flat)
    return jnp.sum(per_tok)   # padded / PAD-target rows already zeroed in-kernel


# ----------------------------------------------------------------------------
# Model wrapper (parameter init + forward glue).
# ----------------------------------------------------------------------------
def init_model(key, vocab, hidden, num_layers, share_embedding=True):
    k = 1.0 / math.sqrt(hidden)
    keys = jax.random.split(key, 3 + num_layers)
    # nn.Embedding default init: N(0, 1).  Stored bf16 (MXU-native on all gens).
    emb = jax.random.normal(keys[0], (vocab, hidden), jnp.float32)
    weights = {"embedding": emb.astype(jnp.bfloat16), "lstm": []}
    for l in range(num_layers):
        kk = jax.random.split(keys[3 + l], 4)
        w_ih = jax.random.uniform(kk[0], (4 * hidden, hidden), jnp.float32, -k, k)
        w_hh = jax.random.uniform(kk[1], (4 * hidden, hidden), jnp.float32, -k, k)
        b_ih = jax.random.uniform(kk[2], (4 * hidden,), jnp.float32, -k, k)
        b_hh = jax.random.uniform(kk[3], (4 * hidden,), jnp.float32, -k, k)
        weights["lstm"].append({
            "w_ih_t": w_ih.T.astype(jnp.bfloat16),           # (H, 4H)
            "w_hh_t": w_hh.T.astype(jnp.bfloat16),           # (H, 4H)
            "b": (b_ih + b_hh).reshape(1, 4 * hidden),        # (1, 4H) f32
        })
    if share_embedding:
        w_out_t = weights["embedding"].T                      # (H, V) tied, bf16
    else:
        w_out = jax.random.uniform(keys[1], (vocab, hidden), jnp.float32, -k, k)
        w_out_t = w_out.T.astype(jnp.bfloat16)
    weights["w_out_t"] = w_out_t
    weights["b_out"] = jax.random.uniform(keys[2], (1, vocab), jnp.float32, -k, k)
    return weights


def recurrent_lm_forward(weights, inputs_ids, targets_ids, *, vocab, hidden,
                         num_layers, smoothing):
    prof = _tpu_profile()
    B, T = inputs_ids.shape
    # Gather embeddings directly time-major: transpose the tiny int32 id matrix
    # instead of the (T, B, H) activation tensor.
    x = jnp.take(weights["embedding"], inputs_ids.T, axis=0)   # (T, B, H) bf16

    # TODO(synk): nn.LSTM inter-layer dropout not modeled (dropout=0.0 here).
    for l in range(num_layers):
        p = weights["lstm"][l]
        x = lstm_recurrent(x, p["w_ih_t"], p["w_hh_t"], p["b"], hidden, prof)

    # Time-major flatten (free reshape, no transpose); targets reordered to
    # match — the masked loss sum is order-invariant.
    hs_flat = x.reshape(T * B, hidden)
    tgt_flat = targets_ids.T.reshape(T * B, 1).astype(jnp.int32)

    total = project_and_loss(hs_flat, weights["w_out_t"], weights["b_out"],
                             tgt_flat, vocab, smoothing, prof)
    # LabelSmoothingLoss with normalize_length=False: masked KL sum / batch size.
    loss = total / B
    return loss, None


if __name__ == "__main__":
    params = {
        "vocab_size": 64,
        "share_embedding": True,
        "smoothing": 0.1,
        "num_layers": 2,
        "hidden_size": 32,
        "dropout": 0.0,
    }
    B, T = 2, 8
    key = jax.random.PRNGKey(0)
    k_w, k_in, k_tg = jax.random.split(key, 3)

    weights = init_model(k_w, params["vocab_size"], params["hidden_size"],
                         params["num_layers"], params["share_embedding"])

    inputs_ids = jax.random.randint(k_in, (B, T), 1, params["vocab_size"], jnp.int32)
    targets_ids = jax.random.randint(k_tg, (B, T), 1, params["vocab_size"], jnp.int32)
    # Put a couple of PAD tokens in targets to exercise the loss mask.
    targets_ids = targets_ids.at[0, T - 1].set(PAD).at[1, T - 2].set(PAD)

    loss, _ = recurrent_lm_forward(
        weights, inputs_ids, targets_ids,
        vocab=params["vocab_size"], hidden=params["hidden_size"],
        num_layers=params["num_layers"], smoothing=params["smoothing"])
    loss = jax.block_until_ready(loss)
    assert loss.shape == () and jnp.isfinite(loss)
    print("KERNEL_OK")
</pallas_src>

<mosaic_0001>
module attributes {stable_mosaic.version = 11 : i64} {
  func.func @lstm_recur_kernel(%arg0: i32, %arg1: i32, %arg2: memref<8x2x32xbf16, #tpu.memory_space<vmem>>, %arg3: memref<32x128xbf16, #tpu.memory_space<vmem>>, %arg4: memref<32x128xbf16, #tpu.memory_space<vmem>>, %arg5: memref<1x128xf32, #tpu.memory_space<vmem>>, %arg6: memref<8x2x32xbf16, #tpu.memory_space<vmem>>, %arg7: memref<2x32xbf16, #tpu.memory_space<vmem>>, %arg8: memref<2x32xf32, #tpu.memory_space<vmem>>) attributes {dimension_semantics = [#tpu.dimension_semantics<parallel>, #tpu.dimension_semantics<arbitrary>], iteration_bounds = array<i64: 1, 1>, scalar_prefetch = 0 : i64, scratch_operands = 2 : i64, tpu.core_type = #tpu.core_type<tc>, window_params = [{transform_indices = @transform_0, window_bounds = array<i64: 8, 2, 32>}, {pipeline_mode = #tpu.pipeline_mode<synchronous>, transform_indices = @transform_1, window_bounds = array<i64: 32, 128>}, {pipeline_mode = #tpu.pipeline_mode<synchronous>, transform_indices = @transform_2, window_bounds = array<i64: 32, 128>}, {pipeline_mode = #tpu.pipeline_mode<synchronous>, transform_indices = @transform_3, window_bounds = array<i64: 1, 128>}, {transform_indices = @transform_4, window_bounds = array<i64: 8, 2, 32>}]} {
    %c0_i32 = arith.constant 0 : i32
    %0 = arith.cmpi eq, %arg1, %c0_i32 : i32
    %1 = arith.extui %0 : i1 to i32
    %c0_i32_0 = arith.constant 0 : i32
    %2 = arith.cmpi ne, %1, %c0_i32_0 : i32
    scf.if %2 {
      %cst_86 = arith.constant 0.000000e+00 : bf16
      %266 = vector.broadcast %cst_86 : bf16 to vector<2x32xbf16>
      %c0_87 = arith.constant 0 : index
      %c0_88 = arith.constant 0 : index
      %267 = vector.load %arg7[%c0_87, %c0_88] : memref<2x32xbf16, #tpu.memory_space<vmem>>, vector<2x32xbf16>
      tpu.vector_store %arg7[%c0_87, %c0_88], %266 {strides = array<i32>} : memref<2x32xbf16, #tpu.memory_space<vmem>>, vector<2x32xbf16>,
      %cst_89 = arith.constant 0.000000e+00 : f32
      %268 = vector.broadcast %cst_89 : f32 to vector<2x32xf32>
      %c0_90 = arith.constant 0 : index
      %c0_91 = arith.constant 0 : index
      %269 = vector.load %arg8[%c0_90, %c0_91] : memref<2x32xf32, #tpu.memory_space<vmem>>, vector<2x32xf32>
      tpu.vector_store %arg8[%c0_90, %c0_91], %268 {strides = array<i32>} : memref<2x32xf32, #tpu.memory_space<vmem>>, vector<2x32xf32>,
    } else {
    }
    %c0 = arith.constant 0 : index
    %c0_1 = arith.constant 0 : index
    %3 = vector.load %arg3[%c0, %c0_1] : memref<32x128xbf16, #tpu.memory_space<vmem>>, vector<32x128xbf16>
    %c0_2 = arith.constant 0 : index
    %c0_3 = arith.constant 0 : index
    %4 = vector.load %arg4[%c0_2, %c0_3] : memref<32x128xbf16, #tpu.memory_space<vmem>>, vector<32x128xbf16>
    %c0_4 = arith.constant 0 : index
    %c0_5 = arith.constant 0 : index
    %5 = vector.load %arg5[%c0_4, %c0_5] : memref<1x128xf32, #tpu.memory_space<vmem>>, vector<1x128xf32>
    %c0_6 = arith.constant 0 : index
    %c0_7 = arith.constant 0 : index
    %6 = vector.load %arg7[%c0_6, %c0_7] : memref<2x32xbf16, #tpu.memory_space<vmem>>, vector<2x32xbf16>
    %c0_8 = arith.constant 0 : index
    %c0_9 = arith.constant 0 : index
    %7 = vector.load %arg8[%c0_8, %c0_9] : memref<2x32xf32, #tpu.memory_space<vmem>>, vector<2x32xf32>
    %c0_10 = arith.constant 0 : index
    %c0_11 = arith.constant 0 : index
    %c0_12 = arith.constant 0 : index
    %8 = vector.load %arg2[%c0_10, %c0_11, %c0_12] : memref<8x2x32xbf16, #tpu.memory_space<vmem>>, vector<1x2x32xbf16>
    %9 = vector.shape_cast %8 : vector<1x2x32xbf16> to vector<2x32xbf16>
    %cst = arith.constant dense<0.000000e+00> : vector<2x128xf32>
    %10 = tpu.matmul %9, %3, %cst {dimension_numbers = #tpu.dot_dimension_numbers<[1], [0], [0], [1], [0, 0, 1, 1], [], []>} : vector<2x32xbf16>, vector<32x128xbf16>, vector<2x128xf32> -> vector<2x128xf32>
    %11 = vector.broadcast %5 : vector<1x128xf32> to vector<2x128xf32>
    %12 = arith.addf %10, %11 : vector<2x128xf32>
    %cst_13 = arith.constant dense<0.000000e+00> : vector<2x128xf32>
    %13 = tpu.matmul %6, %4, %cst_13 {dimension_numbers = #tpu.dot_dimension_numbers<[1], [0], [0], [1], [0, 0, 1, 1], [], []>} : vector<2x32xbf16>, vector<32x128xbf16>, vector<2x128xf32> -> vector<2x128xf32>
    %14 = arith.addf %12, %13 : vector<2x128xf32>
    %15 = vector.extract_strided_slice %14 {offsets = [0, 0], sizes = [2, 64], strides = [1, 1]} : vector<2x128xf32> to vector<2x64xf32>
    %16 = arith.negf %15 : vector<2x64xf32>
    %17 = math.exp %16 : vector<2x64xf32>
    %cst_14 = arith.constant 1.000000e+00 : f32
    %18 = vector.broadcast %cst_14 : f32 to vector<2x64xf32>
    %19 = arith.addf %18, %17 : vector<2x64xf32>
    %20 = arith.divf %18, %19 : vector<2x64xf32>
    %21 = vector.extract_strided_slice %20 {offsets = [0, 0], sizes = [2, 32], strides = [1, 1]} : vector<2x64xf32> to vector<2x32xf32>
    %22 = vector.extract_strided_slice %20 {offsets = [0, 32], sizes = [2, 32], strides = [1, 1]} : vector<2x64xf32> to vector<2x32xf32>
    %23 = vector.extract_strided_slice %14 {offsets = [0, 64], sizes = [2, 32], strides = [1, 1]} : vector<2x128xf32> to vector<2x32xf32>
    %24 = math.tanh %23 : vector<2x32xf32>
    %25 = vector.extract_strided_slice %14 {offsets = [0, 96], sizes = [2, 32], strides = [1, 1]} : vector<2x128xf32> to vector<2x32xf32>
    %26 = arith.negf %25 : vector<2x32xf32>
    %27 = math.exp %26 : vector<2x32xf32>
    %cst_15 = arith.constant 1.000000e+00 : f32
    %28 = vector.broadcast %cst_15 : f32 to vector<2x32xf32>
    %29 = arith.addf %28, %27 : vector<2x32xf32>
    %30 = arith.divf %28, %29 : vector<2x32xf32>
    %31 = arith.mulf %22, %7 : vector<2x32xf32>
    %32 = arith.mulf %21, %24 : vector<2x32xf32>
    %33 = arith.addf %31, %32 : vector<2x32xf32>
    %34 = math.tanh %33 : vector<2x32xf32>
    %35 = arith.mulf %30, %34 : vector<2x32xf32>
    %36 = arith.truncf %35 : vector<2x32xf32> to vector<2x32xbf16>
    %c0_16 = arith.constant 0 : index
    %c0_17 = arith.constant 0 : index
    %c0_18 = arith.constant 0 : index
    %37 = vector.load %arg6[%c0_16, %c0_17, %c0_18] : memref<8x2x32xbf16, #tpu.memory_space<vmem>>, vector<1x2x32xbf16>
    %38 = vector.shape_cast %37 : vector<1x2x32xbf16> to vector<2x32xbf16>
    %39 = vector.shape_cast %36 : vector<2x32xbf16> to vector<1x2x32xbf16>
    tpu.vector_store %arg6[%c0_16, %c0_17, %c0_18], %39 {strides = array<i32>} : memref<8x2x32xbf16, #tpu.memory_space<vmem>>, vector<1x2x32xbf16>,
    %c1 = arith.constant 1 : index
    %c0_19 = arith.constant 0 : index
    %c0_20 = arith.constant 0 : index
    %40 = vector.load %arg2[%c1, %c0_19, %c0_20] : memref<8x2x32xbf16, #tpu.memory_space<vmem>>, vector<1x2x32xbf16>
    %41 = vector.shape_cast %40 : vector<1x2x32xbf16> to vector<2x32xbf16>
    %cst_21 = arith.constant dense<0.000000e+00> : vector<2x128xf32>
    %42 = tpu.matmul %41, %3, %cst_21 {dimension_numbers = #tpu.dot_dimension_numbers<[1], [0], [0], [1], [0, 0, 1, 1], [], []>} : vector<2x32xbf16>, vector<32x128xbf16>, vector<2x128xf32> -> vector<2x128xf32>
    %43 = vector.broadcast %5 : vector<1x128xf32> to vector<2x128xf32>
    %44 = arith.addf %42, %43 : vector<2x128xf32>
    %cst_22 = arith.constant dense<0.000000e+00> : vector<2x128xf32>
    %45 = tpu.matmul %36, %4, %cst_22 {dimension_numbers = #tpu.dot_dimension_numbers<[1], [0], [0], [1], [0, 0, 1, 1], [], []>} : vector<2x32xbf16>, vector<32x128xbf16>, vector<2x128xf32> -> vector<2x128xf32>
    %46 = arith.addf %44, %45 : vector<2x128xf32>
    %47 = vector.extract_strided_slice %46 {offsets = [0, 0], sizes = [2, 64], strides = [1, 1]} : vector<2x128xf32> to vector<2x64xf32>
    %48 = arith.negf %47 : vector<2x64xf32>
    %49 = math.exp %48 : vector<2x64xf32>
    %cst_23 = arith.constant 1.000000e+00 : f32
    %50 = vector.broadcast %cst_23 : f32 to vector<2x64xf32>
    %51 = arith.addf %50, %49 : vector<2x64xf32>
    %52 = arith.divf %50, %51 : vector<2x64xf32>
    %53 = vector.extract_strided_slice %52 {offsets = [0, 0], sizes = [2, 32], strides = [1, 1]} : vector<2x64xf32> to vector<2x32xf32>
    %54 = vector.extract_strided_slice %52 {offsets = [0, 32], sizes = [2, 32], strides = [1, 1]} : vector<2x64xf32> to vector<2x32xf32>
    %55 = vector.extract_strided_slice %46 {offsets = [0, 64], sizes = [2, 32], strides = [1, 1]} : vector<2x128xf32> to vector<2x32xf32>
    %56 = math.tanh %55 : vector<2x32xf32>
    %57 = vector.extract_strided_slice %46 {offsets = [0, 96], sizes = [2, 32], strides = [1, 1]} : vector<2x128xf32> to vector<2x32xf32>
    %58 = arith.negf %57 : vector<2x32xf32>
    %59 = math.exp %58 : vector<2x32xf32>
    %cst_24 = arith.constant 1.000000e+00 : f32
    %60 = vector.broadcast %cst_24 : f32 to vector<2x32xf32>
    %61 = arith.addf %60, %59 : vector<2x32xf32>
    %62 = arith.divf %60, %61 : vector<2x32xf32>
    %63 = arith.mulf %54, %33 : vector<2x32xf32>
    %64 = arith.mulf %53, %56 : vector<2x32xf32>
    %65 = arith.addf %63, %64 : vector<2x32xf32>
    %66 = math.tanh %65 : vector<2x32xf32>
    %67 = arith.mulf %62, %66 : vector<2x32xf32>
    %68 = arith.truncf %67 : vector<2x32xf32> to vector<2x32xbf16>
    %c1_25 = arith.constant 1 : index
    %c0_26 = arith.constant 0 : index
    %c0_27 = arith.constant 0 : index
    %69 = vector.load %arg6[%c1_25, %c0_26, %c0_27] : memref<8x2x32xbf16, #tpu.memory_space<vmem>>, vector<1x2x32xbf16>
    %70 = vector.shape_cast %69 : vector<1x2x32xbf16> to vector<2x32xbf16>
    %71 = vector.shape_cast %68 : vector<2x32xbf16> to vector<1x2x32xbf16>
    tpu.vector_store %arg6[%c1_25, %c0_26, %c0_27], %71 {strides = array<i32>} : memref<8x2x32xbf16, #tpu.memory_space<vmem>>, vector<1x2x32xbf16>,
    %c2 = arith.constant 2 : index
    %c0_28 = arith.constant 0 : index
    %c0_29 = arith.constant 0 : index
    %72 = vector.load %arg2[%c2, %c0_28, %c0_29] : memref<8x2x32xbf16, #tpu.memory_space<vmem>>, vector<1x2x32xbf16>
    %73 = vector.shape_cast %72 : vector<1x2x32xbf16> to vector<2x32xbf16>
    %cst_30 = arith.constant dense<0.000000e+00> : vector<2x128xf32>
    %74 = tpu.matmul %73, %3, %cst_30 {dimension_numbers = #tpu.dot_dimension_numbers<[1], [0], [0], [1], [0, 0, 1, 1], [], []>} : vector<2x32xbf16>, vector<32x128xbf16>, vector<2x128xf32> -> vector<2x128xf32>
    %75 = vector.broadcast %5 : vector<1x128xf32> to vector<2x128xf32>
    %76 = arith.addf %74, %75 : vector<2x128xf32>
    %cst_31 = arith.constant dense<0.000000e+00> : vector<2x128xf32>
    %77 = tpu.matmul %68, %4, %cst_31 {dimension_numbers = #tpu.dot_dimension_numbers<[1], [0], [0], [1], [0, 0, 1, 1], [], []>} : vector<2x32xbf16>, vector<32x128xbf16>, vector<2x128xf32> -> vector<2x128xf32>
    %78 = arith.addf %76, %77 : vector<2x128xf32>
    %79 = vector.extract_strided_slice %78 {offsets = [0, 0], sizes = [2, 64], strides = [1, 1]} : vector<2x128xf32> to vector<2x64xf32>
    %80 = arith.negf %79 : vector<2x64xf32>
    %81 = math.exp %80 : vector<2x64xf32>
    %cst_32 = arith.constant 1.000000e+00 : f32
    %82 = vector.broadcast %cst_32 : f32 to vector<2x64xf32>
    %83 = arith.addf %82, %81 : vector<2x64xf32>
    %84 = arith.divf %82, %83 : vector<2x64xf32>
    %85 = vector.extract_strided_slice %84 {offsets = [0, 0], sizes = [2, 32], strides = [1, 1]} : vector<2x64xf32> to vector<2x32xf32>
    %86 = vector.extract_strided_slice %84 {offsets = [0, 32], sizes = [2, 32], strides = [1, 1]} : vector<2x64xf32> to vector<2x32xf32>
    %87 = vector.extract_strided_slice %78 {offsets = [0, 64], sizes = [2, 32], strides = [1, 1]} : vector<2x128xf32> to vector<2x32xf32>
    %88 = math.tanh %87 : vector<2x32xf32>
    %89 = vector.extract_strided_slice %78 {offsets = [0, 96], sizes = [2, 32], strides = [1, 1]} : vector<2x128xf32> to vector<2x32xf32>
    %90 = arith.negf %89 : vector<2x32xf32>
    %91 = math.exp %90 : vector<2x32xf32>
    %cst_33 = arith.constant 1.000000e+00 : f32
    %92 = vector.broadcast %cst_33 : f32 to vector<2x32xf32>
    %93 = arith.addf %92, %91 : vector<2x32xf32>
    %94 = arith.divf %92, %93 : vector<2x32xf32>
    %95 = arith.mulf %86, %65 : vector<2x32xf32>
    %96 = arith.mulf %85, %88 : vector<2x32xf32>
    %97 = arith.addf %95, %96 : vector<2x32xf32>
    %98 = math.tanh %97 : vector<2x32xf32>
    %99 = arith.mulf %94, %98 : vector<2x32xf32>
    %100 = arith.truncf %99 : vector<2x32xf32> to vector<2x32xbf16>
    %c2_34 = arith.constant 2 : index
    %c0_35 = arith.constant 0 : index
    %c0_36 = arith.constant 0 : index
    %101 = vector.load %arg6[%c2_34, %c0_35, %c0_36] : memref<8x2x32xbf16, #tpu.memory_space<vmem>>, vector<1x2x32xbf16>
    %102 = vector.shape_cast %101 : vector<1x2x32xbf16> to vector<2x32xbf16>
    %103 = vector.shape_cast %100 : vector<2x32xbf16> to vector<1x2x32xbf16>
    tpu.vector_store %arg6[%c2_34, %c0_35, %c0_36], %103 {strides = array<i32>} : memref<8x2x32xbf16, #tpu.memory_space<vmem>>, vector<1x2x32xbf16>,
    %c3 = arith.constant 3 : index
    %c0_37 = arith.constant 0 : index
    %c0_38 = arith.constant 0 : index
    %104 = vector.load %arg2[%c3, %c0_37, %c0_38] : memref<8x2x32xbf16, #tpu.memory_space<vmem>>, vector<1x2x32xbf16>
    %105 = vector.shape_cast %104 : vector<1x2x32xbf16> to vector<2x32xbf16>
    %cst_39 = arith.constant dense<0.000000e+00> : vector<2x128xf32>
    %106 = tpu.matmul %105, %3, %cst_39 {dimension_numbers = #tpu.dot_dimension_numbers<[1], [0], [0], [1], [0, 0, 1, 1], [], []>} : vector<2x32xbf16>, vector<32x128xbf16>, vector<2x128xf32> -> vector<2x128xf32>
    %107 = vector.broadcast %5 : vector<1x128xf32> to vector<2x128xf32>
    %108 = arith.addf %106, %107 : vector<2x128xf32>
    %cst_40 = arith.constant dense<0.000000e+00> : vector<2x128xf32>
    %109 = tpu.matmul %100, %4, %cst_40 {dimension_numbers = #tpu.dot_dimension_numbers<[1], [0], [0], [1], [0, 0, 1, 1], [], []>} : vector<2x32xbf16>, vector<32x128xbf16>, vector<2x128xf32> -> vector<2x128xf32>
    %110 = arith.addf %108, %109 : vector<2x128xf32>
    %111 = vector.extract_strided_slice %110 {offsets = [0, 0], sizes = [2, 64], strides = [1, 1]} : vector<2x128xf32> to vector<2x64xf32>
    %112 = arith.negf %111 : vector<2x64xf32>
    %113 = math.exp %112 : vector<2x64xf32>
    %cst_41 = arith.constant 1.000000e+00 : f32
    %114 = vector.broadcast %cst_41 : f32 to vector<2x64xf32>
    %115 = arith.addf %114, %113 : vector<2x64xf32>
    %116 = arith.divf %114, %115 : vector<2x64xf32>
    %117 = vector.extract_strided_slice %116 {offsets = [0, 0], sizes = [2, 32], strides = [1, 1]} : vector<2x64xf32> to vector<2x32xf32>
    %118 = vector.extract_strided_slice %116 {offsets = [0, 32], sizes = [2, 32], strides = [1, 1]} : vector<2x64xf32> to vector<2x32xf32>
    %119 = vector.extract_strided_slice %110 {offsets = [0, 64], sizes = [2, 32], strides = [1, 1]} : vector<2x128xf32> to vector<2x32xf32>
    %120 = math.tanh %119 : vector<2x32xf32>
    %121 = vector.extract_strided_slice %110 {offsets = [0, 96], sizes = [2, 32], strides = [1, 1]} : vector<2x128xf32> to vector<2x32xf32>
    %122 = arith.negf %121 : vector<2x32xf32>
    %123 = math.exp %122 : vector<2x32xf32>
    %cst_42 = arith.constant 1.000000e+00 : f32
    %124 = vector.broadcast %cst_42 : f32 to vector<2x32xf32>
    %125 = arith.addf %124, %123 : vector<2x32xf32>
    %126 = arith.divf %124, %125 : vector<2x32xf32>
    %127 = arith.mulf %118, %97 : vector<2x32xf32>
    %128 = arith.mulf %117, %120 : vector<2x32xf32>
    %129 = arith.addf %127, %128 : vector<2x32xf32>
    %130 = math.tanh %129 : vector<2x32xf32>
    %131 = arith.mulf %126, %130 : vector<2x32xf32>
    %132 = arith.truncf %131 : vector<2x32xf32> to vector<2x32xbf16>
    %c3_43 = arith.constant 3 : index
    %c0_44 = arith.constant 0 : index
    %c0_45 = arith.constant 0 : index
    %133 = vector.load %arg6[%c3_43, %c0_44, %c0_45] : memref<8x2x32xbf16, #tpu.memory_space<vmem>>, vector<1x2x32xbf16>
    %134 = vector.shape_cast %133 : vector<1x2x32xbf16> to vector<2x32xbf16>
    %135 = vector.shape_cast %132 : vector<2x32xbf16> to vector<1x2x32xbf16>
    tpu.vector_store %arg6[%c3_43, %c0_44, %c0_45], %135 {strides = array<i32>} : memref<8x2x32xbf16, #tpu.memory_space<vmem>>, vector<1x2x32xbf16>,
    %c4 = arith.constant 4 : index
    %c0_46 = arith.constant 0 : index
    %c0_47 = arith.constant 0 : index
    %136 = vector.load %arg2[%c4, %c0_46, %c0_47] : memref<8x2x32xbf16, #tpu.memory_space<vmem>>, vector<1x2x32xbf16>
    %137 = vector.shape_cast %136 : vector<1x2x32xbf16> to vector<2x32xbf16>
    %cst_48 = arith.constant dense<0.000000e+00> : vector<2x128xf32>
    %138 = tpu.matmul %137, %3, %cst_48 {dimension_numbers = #tpu.dot_dimension_numbers<[1], [0], [0], [1], [0, 0, 1, 1], [], []>} : vector<2x32xbf16>, vector<32x128xbf16>, vector<2x128xf32> -> vector<2x128xf32>
    %139 = vector.broadcast %5 : vector<1x128xf32> to vector<2x128xf32>
    %140 = arith.addf %138, %139 : vector<2x128xf32>
    %cst_49 = arith.constant dense<0.000000e+00> : vector<2x128xf32>
    %141 = tpu.matmul %132, %4, %cst_49 {dimension_numbers = #tpu.dot_dimension_numbers<[1], [0], [0], [1], [0, 0, 1, 1], [], []>} : vector<2x32xbf16>, vector<32x128xbf16>, vector<2x128xf32> -> vector<2x128xf32>
    %142 = arith.addf %140, %141 : vector<2x128xf32>
    %143 = vector.extract_strided_slice %142 {offsets = [0, 0], sizes = [2, 64], strides = [1, 1]} : vector<2x128xf32> to vector<2x64xf32>
    %144 = arith.negf %143 : vector<2x64xf32>
    %145 = math.exp %144 : vector<2x64xf32>
    %cst_50 = arith.constant 1.000000e+00 : f32
    %146 = vector.broadcast %cst_50 : f32 to vector<2x64xf32>
    %147 = arith.addf %146, %145 : vector<2x64xf32>
    %148 = arith.divf %146, %147 : vector<2x64xf32>
    %149 = vector.extract_strided_slice %148 {offsets = [0, 0], sizes = [2, 32], strides = [1, 1]} : vector<2x64xf32> to vector<2x32xf32>
    %150 = vector.extract_strided_slice %148 {offsets = [0, 32], sizes = [2, 32], strides = [1, 1]} : vector<2x64xf32> to vector<2x32xf32>
    %151 = vector.extract_strided_slice %142 {offsets = [0, 64], sizes = [2, 32], strides = [1, 1]} : vector<2x128xf32> to vector<2x32xf32>
    %152 = math.tanh %151 : vector<2x32xf32>
    %153 = vector.extract_strided_slice %142 {offsets = [0, 96], sizes = [2, 32], strides = [1, 1]} : vector<2x128xf32> to vector<2x32xf32>
    %154 = arith.negf %153 : vector<2x32xf32>
    %155 = math.exp %154 : vector<2x32xf32>
    %cst_51 = arith.constant 1.000000e+00 : f32
    %156 = vector.broadcast %cst_51 : f32 to vector<2x32xf32>
    %157 = arith.addf %156, %155 : vector<2x32xf32>
    %158 = arith.divf %156, %157 : vector<2x32xf32>
    %159 = arith.mulf %150, %129 : vector<2x32xf32>
    %160 = arith.mulf %149, %152 : vector<2x32xf32>
    %161 = arith.addf %159, %160 : vector<2x32xf32>
    %162 = math.tanh %161 : vector<2x32xf32>
    %163 = arith.mulf %158, %162 : vector<2x32xf32>
    %164 = arith.truncf %163 : vector<2x32xf32> to vector<2x32xbf16>
    %c4_52 = arith.constant 4 : index
    %c0_53 = arith.constant 0 : index
    %c0_54 = arith.constant 0 : index
    %165 = vector.load %arg6[%c4_52, %c0_53, %c0_54] : memref<8x2x32xbf16, #tpu.memory_space<vmem>>, vector<1x2x32xbf16>
    %166 = vector.shape_cast %165 : vector<1x2x32xbf16> to vector<2x32xbf16>
    %167 = vector.shape_cast %164 : vector<2x32xbf16> to vector<1x2x32xbf16>
    tpu.vector_store %arg6[%c4_52, %c0_53, %c0_54], %167 {strides = array<i32>} : memref<8x2x32xbf16, #tpu.memory_space<vmem>>, vector<1x2x32xbf16>,
    %c5 = arith.constant 5 : index
    %c0_55 = arith.constant 0 : index
    %c0_56 = arith.constant 0 : index
    %168 = vector.load %arg2[%c5, %c0_55, %c0_56] : memref<8x2x32xbf16, #tpu.memory_space<vmem>>, vector<1x2x32xbf16>
    %169 = vector.shape_cast %168 : vector<1x2x32xbf16> to vector<2x32xbf16>
    %cst_57 = arith.constant dense<0.000000e+00> : vector<2x128xf32>
    %170 = tpu.matmul %169, %3, %cst_57 {dimension_numbers = #tpu.dot_dimension_numbers<[1], [0], [0], [1], [0, 0, 1, 1], [], []>} : vector<2x32xbf16>, vector<32x128xbf16>, vector<2x128xf32> -> vector<2x128xf32>
    %171 = vector.broadcast %5 : vector<1x128xf32> to vector<2x128xf32>
    %172 = arith.addf %170, %171 : vector<2x128xf32>
    %cst_58 = arith.constant dense<0.000000e+00> : vector<2x128xf32>
    %173 = tpu.matmul %164, %4, %cst_58 {dimension_numbers = #tpu.dot_dimension_numbers<[1], [0], [0], [1], [0, 0, 1, 1], [], []>} : vector<2x32xbf16>, vector<32x128xbf16>, vector<2x128xf32> -> vector<2x128xf32>
    %174 = arith.addf %172, %173 : vector<2x128xf32>
    %175 = vector.extract_strided_slice %174 {offsets = [0, 0], sizes = [2, 64], strides = [1, 1]} : vector<2x128xf32> to vector<2x64xf32>
    %176 = arith.negf %175 : vector<2x64xf32>
    %177 = math.exp %176 : vector<2x64xf32>
    %cst_59 = arith.constant 1.000000e+00 : f32
    %178 = vector.broadcast %cst_59 : f32 to vector<2x64xf32>
    %179 = arith.addf %178, %177 : vector<2x64xf32>
    %180 = arith.divf %178, %179 : vector<2x64xf32>
    %181 = vector.extract_strided_slice %180 {offsets = [0, 0], sizes = [2, 32], strides = [1, 1]} : vector<2x64xf32> to vector<2x32xf32>
    %182 = vector.extract_strided_slice %180 {offsets = [0, 32], sizes = [2, 32], strides = [1, 1]} : vector<2x64xf32> to vector<2x32xf32>
    %183 = vector.extract_strided_slice %174 {offsets = [0, 64], sizes = [2, 32], strides = [1, 1]} : vector<2x128xf32> to vector<2x32xf32>
    %184 = math.tanh %183 : vector<2x32xf32>
    %185 = vector.extract_strided_slice %174 {offsets = [0, 96], sizes = [2, 32], strides = [1, 1]} : vector<2x128xf32> to vector<2x32xf32>
    %186 = arith.negf %185 : vector<2x32xf32>
    %187 = math.exp %186 : vector<2x32xf32>
    %cst_60 = arith.constant 1.000000e+00 : f32
    %188 = vector.broadcast %cst_60 : f32 to vector<2x32xf32>
    %189 = arith.addf %188, %187 : vector<2x32xf32>
    %190 = arith.divf %188, %189 : vector<2x32xf32>
    %191 = arith.mulf %182, %161 : vector<2x32xf32>
    %192 = arith.mulf %181, %184 : vector<2x32xf32>
    %193 = arith.addf %191, %192 : vector<2x32xf32>
    %194 = math.tanh %193 : vector<2x32xf32>
    %195 = arith.mulf %190, %194 : vector<2x32xf32>
    %196 = arith.truncf %195 : vector<2x32xf32> to vector<2x32xbf16>
    %c5_61 = arith.constant 5 : index
    %c0_62 = arith.constant 0 : index
    %c0_63 = arith.constant 0 : index
    %197 = vector.load %arg6[%c5_61, %c0_62, %c0_63] : memref<8x2x32xbf16, #tpu.memory_space<vmem>>, vector<1x2x32xbf16>
    %198 = vector.shape_cast %197 : vector<1x2x32xbf16> to vector<2x32xbf16>
    %199 = vector.shape_cast %196 : vector<2x32xbf16> to vector<1x2x32xbf16>
    tpu.vector_store %arg6[%c5_61, %c0_62, %c0_63], %199 {strides = array<i32>} : memref<8x2x32xbf16, #tpu.memory_space<vmem>>, vector<1x2x32xbf16>,
    %c6 = arith.constant 6 : index
    %c0_64 = arith.constant 0 : index
    %c0_65 = arith.constant 0 : index
    %200 = vector.load %arg2[%c6, %c0_64, %c0_65] : memref<8x2x32xbf16, #tpu.memory_space<vmem>>, vector<1x2x32xbf16>
    %201 = vector.shape_cast %200 : vector<1x2x32xbf16> to vector<2x32xbf16>
    %cst_66 = arith.constant dense<0.000000e+00> : vector<2x128xf32>
    %202 = tpu.matmul %201, %3, %cst_66 {dimension_numbers = #tpu.dot_dimension_numbers<[1], [0], [0], [1], [0, 0, 1, 1], [], []>} : vector<2x32xbf16>, vector<32x128xbf16>, vector<2x128xf32> -> vector<2x128xf32>
    %203 = vector.broadcast %5 : vector<1x128xf32> to vector<2x128xf32>
    %204 = arith.addf %202, %203 : vector<2x128xf32>
    %cst_67 = arith.constant dense<0.000000e+00> : vector<2x128xf32>
    %205 = tpu.matmul %196, %4, %cst_67 {dimension_numbers = #tpu.dot_dimension_numbers<[1], [0], [0], [1], [0, 0, 1, 1], [], []>} : vector<2x32xbf16>, vector<32x128xbf16>, vector<2x128xf32> -> vector<2x128xf32>
    %206 = arith.addf %204, %205 : vector<2x128xf32>
    %207 = vector.extract_strided_slice %206 {offsets = [0, 0], sizes = [2, 64], strides = [1, 1]} : vector<2x128xf32> to vector<2x64xf32>
    %208 = arith.negf %207 : vector<2x64xf32>
    %209 = math.exp %208 : vector<2x64xf32>
    %cst_68 = arith.constant 1.000000e+00 : f32
    %210 = vector.broadcast %cst_68 : f32 to vector<2x64xf32>
    %211 = arith.addf %210, %209 : vector<2x64xf32>
    %212 = arith.divf %210, %211 : vector<2x64xf32>
    %213 = vector.extract_strided_slice %212 {offsets = [0, 0], sizes = [2, 32], strides = [1, 1]} : vector<2x64xf32> to vector<2x32xf32>
    %214 = vector.extract_strided_slice %212 {offsets = [0, 32], sizes = [2, 32], strides = [1, 1]} : vector<2x64xf32> to vector<2x32xf32>
    %215 = vector.extract_strided_slice %206 {offsets = [0, 64], sizes = [2, 32], strides = [1, 1]} : vector<2x128xf32> to vector<2x32xf32>
    %216 = math.tanh %215 : vector<2x32xf32>
    %217 = vector.extract_strided_slice %206 {offsets = [0, 96], sizes = [2, 32], strides = [1, 1]} : vector<2x128xf32> to vector<2x32xf32>
    %218 = arith.negf %217 : vector<2x32xf32>
    %219 = math.exp %218 : vector<2x32xf32>
    %cst_69 = arith.constant 1.000000e+00 : f32
    %220 = vector.broadcast %cst_69 : f32 to vector<2x32xf32>
    %221 = arith.addf %220, %219 : vector<2x32xf32>
    %222 = arith.divf %220, %221 : vector<2x32xf32>
    %223 = arith.mulf %214, %193 : vector<2x32xf32>
    %224 = arith.mulf %213, %216 : vector<2x32xf32>
    %225 = arith.addf %223, %224 : vector<2x32xf32>
    %226 = math.tanh %225 : vector<2x32xf32>
    %227 = arith.mulf %222, %226 : vector<2x32xf32>
    %228 = arith.truncf %227 : vector<2x32xf32> to vector<2x32xbf16>
    %c6_70 = arith.constant 6 : index
    %c0_71 = arith.constant 0 : index
    %c0_72 = arith.constant 0 : index
    %229 = vector.load %arg6[%c6_70, %c0_71, %c0_72] : memref<8x2x32xbf16, #tpu.memory_space<vmem>>, vector<1x2x32xbf16>
    %230 = vector.shape_cast %229 : vector<1x2x32xbf16> to vector<2x32xbf16>
    %231 = vector.shape_cast %228 : vector<2x32xbf16> to vector<1x2x32xbf16>
    tpu.vector_store %arg6[%c6_70, %c0_71, %c0_72], %231 {strides = array<i32>} : memref<8x2x32xbf16, #tpu.memory_space<vmem>>, vector<1x2x32xbf16>,
    %c7 = arith.constant 7 : index
    %c0_73 = arith.constant 0 : index
    %c0_74 = arith.constant 0 : index
    %232 = vector.load %arg2[%c7, %c0_73, %c0_74] : memref<8x2x32xbf16, #tpu.memory_space<vmem>>, vector<1x2x32xbf16>
    %233 = vector.shape_cast %232 : vector<1x2x32xbf16> to vector<2x32xbf16>
    %cst_75 = arith.constant dense<0.000000e+00> : vector<2x128xf32>
    %234 = tpu.matmul %233, %3, %cst_75 {dimension_numbers = #tpu.dot_dimension_numbers<[1], [0], [0], [1], [0, 0, 1, 1], [], []>} : vector<2x32xbf16>, vector<32x128xbf16>, vector<2x128xf32> -> vector<2x128xf32>
    %235 = vector.broadcast %5 : vector<1x128xf32> to vector<2x128xf32>
    %236 = arith.addf %234, %235 : vector<2x128xf32>
    %cst_76 = arith.constant dense<0.000000e+00> : vector<2x128xf32>
    %237 = tpu.matmul %228, %4, %cst_76 {dimension_numbers = #tpu.dot_dimension_numbers<[1], [0], [0], [1], [0, 0, 1, 1], [], []>} : vector<2x32xbf16>, vector<32x128xbf16>, vector<2x128xf32> -> vector<2x128xf32>
    %238 = arith.addf %236, %237 : vector<2x128xf32>
    %239 = vector.extract_strided_slice %238 {offsets = [0, 0], sizes = [2, 64], strides = [1, 1]} : vector<2x128xf32> to vector<2x64xf32>
    %240 = arith.negf %239 : vector<2x64xf32>
    %241 = math.exp %240 : vector<2x64xf32>
    %cst_77 = arith.constant 1.000000e+00 : f32
    %242 = vector.broadcast %cst_77 : f32 to vector<2x64xf32>
    %243 = arith.addf %242, %241 : vector<2x64xf32>
    %244 = arith.divf %242, %243 : vector<2x64xf32>
    %245 = vector.extract_strided_slice %244 {offsets = [0, 0], sizes = [2, 32], strides = [1, 1]} : vector<2x64xf32> to vector<2x32xf32>
    %246 = vector.extract_strided_slice %244 {offsets = [0, 32], sizes = [2, 32], strides = [1, 1]} : vector<2x64xf32> to vector<2x32xf32>
    %247 = vector.extract_strided_slice %238 {offsets = [0, 64], sizes = [2, 32], strides = [1, 1]} : vector<2x128xf32> to vector<2x32xf32>
    %248 = math.tanh %247 : vector<2x32xf32>
    %249 = vector.extract_strided_slice %238 {offsets = [0, 96], sizes = [2, 32], strides = [1, 1]} : vector<2x128xf32> to vector<2x32xf32>
    %250 = arith.negf %249 : vector<2x32xf32>
    %251 = math.exp %250 : vector<2x32xf32>
    %cst_78 = arith.constant 1.000000e+00 : f32
    %252 = vector.broadcast %cst_78 : f32 to vector<2x32xf32>
    %253 = arith.addf %252, %251 : vector<2x32xf32>
    %254 = arith.divf %252, %253 : vector<2x32xf32>
    %255 = arith.mulf %246, %225 : vector<2x32xf32>
    %256 = arith.mulf %245, %248 : vector<2x32xf32>
    %257 = arith.addf %255, %256 : vector<2x32xf32>
    %258 = math.tanh %257 : vector<2x32xf32>
    %259 = arith.mulf %254, %258 : vector<2x32xf32>
    %260 = arith.truncf %259 : vector<2x32xf32> to vector<2x32xbf16>
    %c7_79 = arith.constant 7 : index
    %c0_80 = arith.constant 0 : index
    %c0_81 = arith.constant 0 : index
    %261 = vector.load %arg6[%c7_79, %c0_80, %c0_81] : memref<8x2x32xbf16, #tpu.memory_space<vmem>>, vector<1x2x32xbf16>
    %262 = vector.shape_cast %261 : vector<1x2x32xbf16> to vector<2x32xbf16>
    %263 = vector.shape_cast %260 : vector<2x32xbf16> to vector<1x2x32xbf16>
    tpu.vector_store %arg6[%c7_79, %c0_80, %c0_81], %263 {strides = array<i32>} : memref<8x2x32xbf16, #tpu.memory_space<vmem>>, vector<1x2x32xbf16>,
    %c0_82 = arith.constant 0 : index
    %c0_83 = arith.constant 0 : index
    %264 = vector.load %arg7[%c0_82, %c0_83] : memref<2x32xbf16, #tpu.memory_space<vmem>>, vector<2x32xbf16>
    tpu.vector_store %arg7[%c0_82, %c0_83], %260 {strides = array<i32>} : memref<2x32xbf16, #tpu.memory_space<vmem>>, vector<2x32xbf16>,
    %c0_84 = arith.constant 0 : index
    %c0_85 = arith.constant 0 : index
    %265 = vector.load %arg8[%c0_84, %c0_85] : memref<2x32xf32, #tpu.memory_space<vmem>>, vector<2x32xf32>
    tpu.vector_store %arg8[%c0_84, %c0_85], %257 {strides = array<i32>} : memref<2x32xf32, #tpu.memory_space<vmem>>, vector<2x32xf32>,
    return
  }
  func.func @transform_0(%arg0: i32, %arg1: i32) -> (i32, i32, i32) {
    %c0_i32 = arith.constant 0 : i32
    %c0_i32_0 = arith.constant 0 : i32
    return %arg1, %arg0, %c0_i32 : i32, i32, i32
  }
  func.func @transform_1(%arg0: i32, %arg1: i32) -> (i32, i32) {
    %c0_i32 = arith.constant 0 : i32
    %c0_i32_0 = arith.constant 0 : i32
    %c0_i32_1 = arith.constant 0 : i32
    return %c0_i32, %c0_i32_0 : i32, i32
  }
  func.func @transform_2(%arg0: i32, %arg1: i32) -> (i32, i32) {
    %c0_i32 = arith.constant 0 : i32
    %c0_i32_0 = arith.constant 0 : i32
    %c0_i32_1 = arith.constant 0 : i32
    return %c0_i32, %c0_i32_0 : i32, i32
  }
  func.func @transform_3(%arg0: i32, %arg1: i32) -> (i32, i32) {
    %c0_i32 = arith.constant 0 : i32
    %c0_i32_0 = arith.constant 0 : i32
    %c0_i32_1 = arith.constant 0 : i32
    return %c0_i32, %c0_i32_0 : i32, i32
  }
  func.func @transform_4(%arg0: i32, %arg1: i32) -> (i32, i32, i32) {
    %c0_i32 = arith.constant 0 : i32
    %c0_i32_0 = arith.constant 0 : i32
    return %arg1, %arg0, %c0_i32 : i32, i32, i32
  }
}

</mosaic_0001>

<llo_original>
// kernel: tpu_custom_call.1
$region0: #{tpu_custom_call.1}
  #allocation0 [shape = 'u32[]', space=smem, size = 0x4, offset = 0x4, fixed_abs, tag = 'smem constant byte address 0x4 - core index']
  #allocation1 [shape = 'u32[72,128]{1,0:T(1,128)}', space=vmem, size = 0x9000, scoped, tag = 'internal scratch']
  #allocation2 [shape = 'bf16[2,32]{1,0:T(2,128)(2,1)}', space=vmem, size = 0x200, scoped, tag = 'scratch operand']
  #allocation3 [shape = 'f32[2,32]{1,0:T(2,128)}', space=vmem, size = 0x400, scoped, tag = 'scratch operand']
  %s0 = inlined_call_operand.hbm [shape: bf16[8,2,32], index: 0, kind: input, shape index: {}]
  %s1 = inlined_call_operand.hbm [shape: bf16[32,128], index: 1, kind: input, shape index: {}]
  %s2 = inlined_call_operand.hbm [shape: bf16[32,128], index: 2, kind: input, shape index: {}]
  %s3 = inlined_call_operand.vmem [shape: f32[1,128], index: 3, kind: input, shape index: {}]
  %s4 = inlined_call_operand.hbm [shape: bf16[8,2,32], index: 4, kind: output, shape index: {}]
  %s5 = sld [smem:[#allocation0]]
  $region42: #{tpu_custom_call.1} parent=0
    _
  %s7 = ssub.s32 1, %s5
  %s8 = scalar_select 0, %s7, %s5
  $region1: #{tpu_custom_call.1} parent=0
    #allocation4 [shape = 'u8[4096]{0}', space=vmem, size = 0x1000, scoped, tag = 'input window, operand 0, single buffered']
    #allocation5 [shape = 's32[1]{0}', space=sflag, size = 0x4, scoped, tag = 'scoped memory for tpu_custom_call.1']
    #allocation6 [shape = 's32[1]{0}', space=sflag, size = 0x4, scoped, tag = 'scoped memory for tpu_custom_call.1']
    #allocation7 [shape = 'u8[8192]{0}', space=vmem, size = 0x2000, scoped, tag = 'input window, operand 1, single buffered']
    #allocation8 [shape = 's32[1]{0}', space=sflag, size = 0x4, scoped, tag = 'scoped memory for tpu_custom_call.1']
    #allocation9 [shape = 'u8[8192]{0}', space=vmem, size = 0x2000, scoped, tag = 'input window, operand 2, single buffered']
    #allocation10 [shape = 'u8[4096]{0}', space=vmem, size = 0x1000, scoped, tag = 'output window, operand 0, single buffered']
    %9 = vsyncpa [#allocation5], 0
    %10 = vsyncpa [#allocation8], 0
    %11 = vsyncpa [#allocation6], 0
    // Predicated region
    $region2: #{tpu_custom_call.1} parent=1 // pred_check
      _
    $region3: #{tpu_custom_call.1} parent=1 // pred_check_branch
      %13 = sbr.rel (0) target = $region5
    $region4: #{tpu_custom_call.1} parent=1 // pred_region
      %15 = vsyncadd [#allocation5], 0
      %s16 = sshll.u32 %s0, 4
      %s17 = int_to_ptr.hbm [resolvable:$true] %s16
      %s18 = sshll.u32 [#allocation4], 4
      %s19 = int_to_ptr.vmem [resolvable:$true] %s18
      %24 = dma.hbm_to_vmem [thread:$0]  %s17, 128, %s19, [#allocation5], 16, 16, 1
    $region5: #{tpu_custom_call.1} parent=1 // pred_fallthru
      _
    // Predicated region
    $region6: #{tpu_custom_call.1} parent=1 // pred_check
      _
    $region7: #{tpu_custom_call.1} parent=1 // pred_check_branch
      %26 = sbr.rel (0) target = $region9
    $region8: #{tpu_custom_call.1} parent=1 // pred_region
      %28 = vsyncadd [#allocation8], 0
      %s29 = sshll.u32 %s1, 4
      %s30 = int_to_ptr.hbm [resolvable:$true] %s29
      %s31 = sshll.u32 [#allocation7], 4
      %s32 = int_to_ptr.vmem [resolvable:$true] %s31
      %37 = dma.hbm_to_vmem [thread:$0]  %s30, 256, %s32, [#allocation8], 64, 64, 4
    $region9: #{tpu_custom_call.1} parent=1 // pred_fallthru
      _
    // Predicated region
    $region10: #{tpu_custom_call.1} parent=1 // pred_check
      _
    $region11: #{tpu_custom_call.1} parent=1 // pred_check_branch
      %39 = sbr.rel (0) target = $region13
    $region12: #{tpu_custom_call.1} parent=1 // pred_region
      %41 = vsyncadd [#allocation8], 0
      %s42 = sshll.u32 %s2, 4
      %s43 = int_to_ptr.hbm [resolvable:$true] %s42
      %s44 = sshll.u32 [#allocation9], 4
      %s45 = int_to_ptr.vmem [resolvable:$true] %s44
      %50 = dma.hbm_to_vmem [thread:$0]  %s43, 256, %s45, [#allocation8], 64, 64, 4
    $region13: #{tpu_custom_call.1} parent=1 // pred_fallthru
      _
    // Predicated region
    $region14: #{tpu_custom_call.1} parent=1 // pred_check
      _
    $region15: #{tpu_custom_call.1} parent=1 // pred_check_branch
      %52 = sbr.rel (0) target = $region17
    $region16: #{tpu_custom_call.1} parent=1 // pred_region
      _
    $region17: #{tpu_custom_call.1} parent=1 // pred_fallthru
      _
    // Predicated region
    $region18: #{tpu_custom_call.1} parent=1 // pred_check
      _
    $region19: #{tpu_custom_call.1} parent=1 // pred_check_branch
      %54 = sbr.rel (0) target = $region21
    $region20: #{tpu_custom_call.1} parent=1 // pred_region
      %56 = dma.done [#allocation5], 128
    $region21: #{tpu_custom_call.1} parent=1 // pred_fallthru
      _
    // Predicated region
    $region22: #{tpu_custom_call.1} parent=1 // pred_check
      _
    $region23: #{tpu_custom_call.1} parent=1 // pred_check_branch
      %58 = sbr.rel (0) target = $region25
    $region24: #{tpu_custom_call.1} parent=1 // pred_region
      %60 = dma.done [#allocation8], 256
    $region25: #{tpu_custom_call.1} parent=1 // pred_fallthru
      _
    // Predicated region
    $region26: #{tpu_custom_call.1} parent=1 // pred_check
      _
    $region27: #{tpu_custom_call.1} parent=1 // pred_check_branch
      %62 = sbr.rel (0) target = $region29
    $region28: #{tpu_custom_call.1} parent=1 // pred_region
      %64 = dma.done [#allocation8], 256
    $region29: #{tpu_custom_call.1} parent=1 // pred_fallthru
      _
    %p66 = scmp.eq.s32.totalorder 0, 0
    // Predicated region
    $region30: #{tpu_custom_call.1} parent=1 // pred_check
      %p67 = pneg %p66
    $region31: #{tpu_custom_call.1} parent=1 // pred_check_branch
      %69 = sbr.rel (%p67) target = $region33
    $region32: #{tpu_custom_call.1} parent=1 // pred_region
      %vm70 = vcmask 253952
      %71 = vst.msk [vmem:[#allocation2] sm:$0x1] %vm70, 0
      %vm72 = vcmask 254976
      %73 = vst.msk [vmem:[#allocation3] sm:$0x3] %vm72, 0.0
    $region33: #{tpu_custom_call.1} parent=1 // pred_fallthru
      _
    %v74 = vld [vmem:[#allocation7] sm:$0xf]
    %v75 = vld [vmem:[#allocation7 + $0x4] sm:$0xf]
    %v76 = vld [vmem:[#allocation7 + $0x8] sm:$0xf]
    %v77 = vld [vmem:[#allocation7 + $0xc] sm:$0xf]
    %v78 = vld [vmem:[#allocation9] sm:$0xf]
    %v79 = vld [vmem:[#allocation9 + $0x4] sm:$0xf]
    %v80 = vld [vmem:[#allocation9 + $0x8] sm:$0xf]
    %v81 = vld [vmem:[#allocation9 + $0xc] sm:$0xf]
    %v82 = vld [vmem:[%s3] sm:$0x1]
    %v83 = vld [vmem:[#allocation2] sm:$0x1]
    %v84 = vld [vmem:[#allocation3] sm:$0x3]
    %v85 = vld [vmem:[#allocation4] sm:$0x1]
    %v87 = vperm.slane %v82, 0
    %v93 = vunpack.c.l.b16 %v74
    %v94 = vunpack.c.l.b16 %v75
    %v95 = vunpack.c.l.b16 %v76
    %v96 = vunpack.c.l.b16 %v77
    %v97 = vpack.c.b16 %v94, %v93
    %v98 = vpack.c.b16 %v96, %v95
    %vm101 = vcmask 261120
    %v103 = vsel %vm101, %v85, 0
    %105 = vmatpush.bf16.msra.mxu0 0
    %106 = vmatpush.bf16.msra.mxu0 0
    %107 = vmatpush.bf16.msra.mxu0 0
    %108 = vmatpush.bf16.msra.mxu0 0
    %109 = vmatpush.bf16.msra.mxu0 0
    %110 = vmatpush.bf16.msra.mxu0 0
    %111 = vmatpush.bf16.msra.mxu0 %v98
    %112 = vmatpush.bf16.msra.mxu0 %v97
    %113 = vmatmul.bf16.gmra.mxu0 %v103
    %v114 = vpop.f32.mrf.mxu0
    %v115 = vadd.f32 %v87, %v114
    %v116 = vpop.f32.mrf.mxu0
    %117 = vdwg.mxu0
    %v122 = vunpack.c.l.b16 %v78
    %v123 = vunpack.c.l.b16 %v79
    %v124 = vunpack.c.l.b16 %v80
    %v125 = vunpack.c.l.b16 %v81
    %v126 = vpack.c.b16 %v123, %v122
    %v127 = vpack.c.b16 %v125, %v124
    %v131 = vsel %vm101, %v83, 0
    %133 = vmatpush.bf16.msra.mxu0 0
    %134 = vmatpush.bf16.msra.mxu0 0
    %135 = vmatpush.bf16.msra.mxu0 0
    %136 = vmatpush.bf16.msra.mxu0 0
    %137 = vmatpush.bf16.msra.mxu0 0
    %138 = vmatpush.bf16.msra.mxu0 0
    %139 = vmatpush.bf16.msra.mxu0 %v127
    %140 = vmatpush.bf16.msra.mxu0 %v126
    %141 = vmatmul.bf16.gmra.mxu0 %v131
    %v142 = vpop.f32.mrf.mxu0
    %v143 = vadd.f32 0.0, %v142
    %v144 = vpop.f32.mrf.mxu0
    %145 = vdwg.mxu0
    %v146 = vadd.f32 %v115, %v143
    %v147 = vxor.u32 %v146, 2147483648
    %v148 = vmul.f32 %v147, 1.442695
    %v149 = vpow.pop %v148
    %v150 = vadd.f32 %v149, 1.0
    %v151 = vrcp.pop %v150
    %v152 = vmul.f32 %v150, %v151
    %v153 = vsub.f32 1.0, %v152
    %v154 = vmul.f32 %v151, %v153
    %v155 = vadd.f32 %v151, %v154
    %vm156 = vweird.f32 %v150
    %vm157 = vweird.f32 %v151
    %vm158 = vmor %vm156, %vm157
    %v159 = vsel %vm158, %v151, %v155
    %v160 = vand.u32 2147483647, %v150
    %vm161 = vcmp.eq.f32.partialorder %v160, 8.507059e+37
    %v162 = vand.u32 %v150, 2147483648
    %v163 = vor.u32 1.1754944e-38, %v162
    %v164 = vsel %vm161, %v163, %v159
    %v165 = vmul.f32 1.0, %v164
    %v166 = vtanh.pop %v146
    %168 = vrot.lane.b32.xlu0 %v84, 32
    %v169 = vpop.permute.xlu0 %168
    %v171 = vmul.f32 %v165, %v169
    %173 = vrot.lane.b32.xlu0 %v166, 64
    %v174 = vpop.permute.xlu0 %173
    %v176 = vmul.f32 %v165, %v174
    %178 = vrot.lane.b32.xlu0 %v176, 32
    %v179 = vpop.permute.xlu0 %178
    %v181 = vadd.f32 %v171, %v179
    %v182 = vtanh.pop %v181
    %184 = vrot.lane.b32.xlu0 %v182, 64
    %v185 = vpop.permute.xlu0 %184
    %v187 = vmul.f32 %v165, %v185
    %v188 = vpack.c.bf16 %v187, %v187
    %v190 = vrot.slane %v188, 3
    %vm191 = vcmask 1040384
    %v194 = vsel %vm191, %v188, %v190
    %196 = vrot.lane.b32.xlu0 %v194, 32
    %v197 = vpop.permute.xlu0 %196
    %vm199 = vcmask 253952
    %200 = vst.msk [vmem:[#allocation10] sm:$0x1] %vm199, %v197
    %s201 = scalar_lea.vmem [#allocation4], 1
    %v202 = vld [vmem:[%s201] sm:$0x1]
    %v204 = vsel %vm101, %v202, 0
    %206 = vmatpush.bf16.msra.mxu0 0
    %207 = vmatpush.bf16.msra.mxu0 0
    %208 = vmatpush.bf16.msra.mxu0 0
    %209 = vmatpush.bf16.msra.mxu0 0
    %210 = vmatpush.bf16.msra.mxu0 0
    %211 = vmatpush.bf16.msra.mxu0 0
    %212 = vmatpush.bf16.msra.mxu0 %v98
    %213 = vmatpush.bf16.msra.mxu0 %v97
    %214 = vmatmul.bf16.gmra.mxu0 %v204
    %v215 = vpop.f32.mrf.mxu0
    %v216 = vadd.f32 %v87, %v215
    %v217 = vpop.f32.mrf.mxu0
    %218 = vdwg.mxu0
    %v219 = vunpack.c.l.b16 %v188
    %v220 = vpack.c.b16 %v219, %v219
    %221 = vrot.lane.b32.xlu0 %v220, 32
    %v222 = vpop.permute.xlu0 %221
    %v224 = vsel %vm101, %v222, 0
    %226 = vmatpush.bf16.msra.mxu0 0
    %227 = vmatpush.bf16.msra.mxu0 0
    %228 = vmatpush.bf16.msra.mxu0 0
    %229 = vmatpush.bf16.msra.mxu0 0
    %230 = vmatpush.bf16.msra.mxu0 0
    %231 = vmatpush.bf16.msra.mxu0 0
    %232 = vmatpush.bf16.msra.mxu0 %v127
    %233 = vmatpush.bf16.msra.mxu0 %v126
    %234 = vmatmul.bf16.gmra.mxu0 %v224
    %v235 = vpop.f32.mrf.mxu0
    %v236 = vadd.f32 0.0, %v235
    %v237 = vpop.f32.mrf.mxu0
    %238 = vdwg.mxu0
    %v239 = vadd.f32 %v216, %v236
    %v240 = vxor.u32 %v239, 2147483648
    %v241 = vmul.f32 %v240, 1.442695
    %v242 = vpow.pop %v241
    %v243 = vadd.f32 %v242, 1.0
    %v244 = vrcp.pop %v243
    %v245 = vmul.f32 %v243, %v244
    %v246 = vsub.f32 1.0, %v245
    %v247 = vmul.f32 %v244, %v246
    %v248 = vadd.f32 %v244, %v247
    %vm249 = vweird.f32 %v243
    %vm250 = vweird.f32 %v244
    %vm251 = vmor %vm249, %vm250
    %v252 = vsel %vm251, %v244, %v248
    %v253 = vand.u32 2147483647, %v243
    %vm254 = vcmp.eq.f32.partialorder %v253, 8.507059e+37
    %v255 = vand.u32 %v243, 2147483648
    %v256 = vor.u32 1.1754944e-38, %v255
    %v257 = vsel %vm254, %v256, %v252
    %v258 = vmul.f32 1.0, %v257
    %v259 = vtanh.pop %v239
    %v260 = vmul.f32 %v258, %v181
    %262 = vrot.lane.b32.xlu0 %v259, 64
    %v263 = vpop.permute.xlu0 %262
    %v265 = vmul.f32 %v258, %v263
    %267 = vrot.lane.b32.xlu0 %v265, 32
    %v268 = vpop.permute.xlu0 %267
    %v270 = vadd.f32 %v260, %v268
    %v271 = vtanh.pop %v270
    %273 = vrot.lane.b32.xlu0 %v271, 64
    %v274 = vpop.permute.xlu0 %273
    %v276 = vmul.f32 %v258, %v274
    %v277 = vpack.c.bf16 %v276, %v276
    %v279 = vrot.slane %v277, 3
    %v282 = vsel %vm191, %v277, %v279
    %284 = vrot.lane.b32.xlu0 %v282, 32
    %v285 = vpop.permute.xlu0 %284
    %s287 = scalar_lea.vmem [#allocation10], 1
    %288 = vst.msk [vmem:[%s287] sm:$0x1] %vm199, %v285
    %s289 = scalar_lea.vmem [#allocation4], 2
    %v290 = vld [vmem:[%s289] sm:$0x1]
    %v292 = vsel %vm101, %v290, 0
    %294 = vmatpush.bf16.msra.mxu0 0
    %295 = vmatpush.bf16.msra.mxu0 0
    %296 = vmatpush.bf16.msra.mxu0 0
    %297 = vmatpush.bf16.msra.mxu0 0
    %298 = vmatpush.bf16.msra.mxu0 0
    %299 = vmatpush.bf16.msra.mxu0 0
    %300 = vmatpush.bf16.msra.mxu0 %v98
    %301 = vmatpush.bf16.msra.mxu0 %v97
    %302 = vmatmul.bf16.gmra.mxu0 %v292
    %v303 = vpop.f32.mrf.mxu0
    %v304 = vadd.f32 %v87, %v303
    %v305 = vpop.f32.mrf.mxu0
    %306 = vdwg.mxu0
    %v307 = vunpack.c.l.b16 %v277
    %v308 = vpack.c.b16 %v307, %v307
    %309 = vrot.lane.b32.xlu0 %v308, 32
    %v310 = vpop.permute.xlu0 %309
    %v312 = vsel %vm101, %v310, 0
    %314 = vmatpush.bf16.msra.mxu0 0
    %315 = vmatpush.bf16.msra.mxu0 0
    %316 = vmatpush.bf16.msra.mxu0 0
    %317 = vmatpush.bf16.msra.mxu0 0
    %318 = vmatpush.bf16.msra.mxu0 0
    %319 = vmatpush.bf16.msra.mxu0 0
    %320 = vmatpush.bf16.msra.mxu0 %v127
    %321 = vmatpush.bf16.msra.mxu0 %v126
    %322 = vmatmul.bf16.gmra.mxu0 %v312
    %v323 = vpop.f32.mrf.mxu0
    %v324 = vadd.f32 0.0, %v323
    %v325 = vpop.f32.mrf.mxu0
    %326 = vdwg.mxu0
    %v327 = vadd.f32 %v304, %v324
    %v328 = vxor.u32 %v327, 2147483648
    %v329 = vmul.f32 %v328, 1.442695
    %v330 = vpow.pop %v329
    %v331 = vadd.f32 %v330, 1.0
    %v332 = vrcp.pop %v331
    %v333 = vmul.f32 %v331, %v332
    %v334 = vsub.f32 1.0, %v333
    %v335 = vmul.f32 %v332, %v334
    %v336 = vadd.f32 %v332, %v335
    %vm337 = vweird.f32 %v331
    %vm338 = vweird.f32 %v332
    %vm339 = vmor %vm337, %vm338
    %v340 = vsel %vm339, %v332, %v336
    %v341 = vand.u32 2147483647, %v331
    %vm342 = vcmp.eq.f32.partialorder %v341, 8.507059e+37
    %v343 = vand.u32 %v331, 2147483648
    %v344 = vor.u32 1.1754944e-38, %v343
    %v345 = vsel %vm342, %v344, %v340
    %v346 = vmul.f32 1.0, %v345
    %v347 = vtanh.pop %v327
    %v348 = vmul.f32 %v346, %v270
    %350 = vrot.lane.b32.xlu0 %v347, 64
    %v351 = vpop.permute.xlu0 %350
    %v353 = vmul.f32 %v346, %v351
    %355 = vrot.lane.b32.xlu0 %v353, 32
    %v356 = vpop.permute.xlu0 %355
    %v358 = vadd.f32 %v348, %v356
    %v359 = vtanh.pop %v358
    %361 = vrot.lane.b32.xlu0 %v359, 64
    %v362 = vpop.permute.xlu0 %361
    %v364 = vmul.f32 %v346, %v362
    %v365 = vpack.c.bf16 %v364, %v364
    %v367 = vrot.slane %v365, 3
    %v370 = vsel %vm191, %v365, %v367
    %372 = vrot.lane.b32.xlu0 %v370, 32
    %v373 = vpop.permute.xlu0 %372
    %s375 = scalar_lea.vmem [#allocation10], 2
    %376 = vst.msk [vmem:[%s375] sm:$0x1] %vm199, %v373
    %s377 = scalar_lea.vmem [#allocation4], 3
    %v378 = vld [vmem:[%s377] sm:$0x1]
    %v380 = vsel %vm101, %v378, 0
    %382 = vmatpush.bf16.msra.mxu0 0
    %383 = vmatpush.bf16.msra.mxu0 0
    %384 = vmatpush.bf16.msra.mxu0 0
    %385 = vmatpush.bf16.msra.mxu0 0
    %386 = vmatpush.bf16.msra.mxu0 0
    %387 = vmatpush.bf16.msra.mxu0 0
    %388 = vmatpush.bf16.msra.mxu0 %v98
    %389 = vmatpush.bf16.msra.mxu0 %v97
    %390 = vmatmul.bf16.gmra.mxu0 %v380
    %v391 = vpop.f32.mrf.mxu0
    %v392 = vadd.f32 %v87, %v391
    %v393 = vpop.f32.mrf.mxu0
    %394 = vdwg.mxu0
    %v395 = vunpack.c.l.b16 %v365
    %v396 = vpack.c.b16 %v395, %v395
    %397 = vrot.lane.b32.xlu0 %v396, 32
    %v398 = vpop.permute.xlu0 %397
    %v400 = vsel %vm101, %v398, 0
    %402 = vmatpush.bf16.msra.mxu0 0
    %403 = vmatpush.bf16.msra.mxu0 0
    %404 = vmatpush.bf16.msra.mxu0 0
    %405 = vmatpush.bf16.msra.mxu0 0
    %406 = vmatpush.bf16.msra.mxu0 0
    %407 = vmatpush.bf16.msra.mxu0 0
    %408 = vmatpush.bf16.msra.mxu0 %v127
    %409 = vmatpush.bf16.msra.mxu0 %v126
    %410 = vmatmul.bf16.gmra.mxu0 %v400
    %v411 = vpop.f32.mrf.mxu0
    %v412 = vadd.f32 0.0, %v411
    %v413 = vpop.f32.mrf.mxu0
    %414 = vdwg.mxu0
    %v415 = vadd.f32 %v392, %v412
    %v416 = vxor.u32 %v415, 2147483648
    %v417 = vmul.f32 %v416, 1.442695
    %v418 = vpow.pop %v417
    %v419 = vadd.f32 %v418, 1.0
    %v420 = vrcp.pop %v419
    %v421 = vmul.f32 %v419, %v420
    %v422 = vsub.f32 1.0, %v421
    %v423 = vmul.f32 %v420, %v422
    %v424 = vadd.f32 %v420, %v423
    %vm425 = vweird.f32 %v419
    %vm426 = vweird.f32 %v420
    %vm427 = vmor %vm425, %vm426
    %v428 = vsel %vm427, %v420, %v424
    %v429 = vand.u32 2147483647, %v419
    %vm430 = vcmp.eq.f32.partialorder %v429, 8.507059e+37
    %v431 = vand.u32 %v419, 2147483648
    %v432 = vor.u32 1.1754944e-38, %v431
    %v433 = vsel %vm430, %v432, %v428
    %v434 = vmul.f32 1.0, %v433
    %v435 = vtanh.pop %v415
    %v436 = vmul.f32 %v434, %v358
    %438 = vrot.lane.b32.xlu0 %v435, 64
    %v439 = vpop.permute.xlu0 %438
    %v441 = vmul.f32 %v434, %v439
    %443 = vrot.lane.b32.xlu0 %v441, 32
    %v444 = vpop.permute.xlu0 %443
    %v446 = vadd.f32 %v436, %v444
    %v447 = vtanh.pop %v446
    %449 = vrot.lane.b32.xlu0 %v447, 64
    %v450 = vpop.permute.xlu0 %449
    %v452 = vmul.f32 %v434, %v450
    %v453 = vpack.c.bf16 %v452, %v452
    %v455 = vrot.slane %v453, 3
    %v458 = vsel %vm191, %v453, %v455
    %460 = vrot.lane.b32.xlu0 %v458, 32
    %v461 = vpop.permute.xlu0 %460
    %s463 = scalar_lea.vmem [#allocation10], 3
    %464 = vst.msk [vmem:[%s463] sm:$0x1] %vm199, %v461
    %s465 = scalar_lea.vmem [#allocation4], 4
    %v466 = vld [vmem:[%s465] sm:$0x1]
    %v468 = vsel %vm101, %v466, 0
    %470 = vmatpush.bf16.msra.mxu0 0
    %471 = vmatpush.bf16.msra.mxu0 0
    %472 = vmatpush.bf16.msra.mxu0 0
    %473 = vmatpush.bf16.msra.mxu0 0
    %474 = vmatpush.bf16.msra.mxu0 0
    %475 = vmatpush.bf16.msra.mxu0 0
    %476 = vmatpush.bf16.msra.mxu0 %v98
    %477 = vmatpush.bf16.msra.mxu0 %v97
    %478 = vmatmul.bf16.gmra.mxu0 %v468
    %v479 = vpop.f32.mrf.mxu0
    %v480 = vadd.f32 %v87, %v479
    %v481 = vpop.f32.mrf.mxu0
    %482 = vdwg.mxu0
    %v483 = vunpack.c.l.b16 %v453
    %v484 = vpack.c.b16 %v483, %v483
    %485 = vrot.lane.b32.xlu0 %v484, 32
    %v486 = vpop.permute.xlu0 %485
    %v488 = vsel %vm101, %v486, 0
    %490 = vmatpush.bf16.msra.mxu0 0
    %491 = vmatpush.bf16.msra.mxu0 0
    %492 = vmatpush.bf16.msra.mxu0 0
    %493 = vmatpush.bf16.msra.mxu0 0
    %494 = vmatpush.bf16.msra.mxu0 0
    %495 = vmatpush.bf16.msra.mxu0 0
    %496 = vmatpush.bf16.msra.mxu0 %v127
    %497 = vmatpush.bf16.msra.mxu0 %v126
    %498 = vmatmul.bf16.gmra.mxu0 %v488
    %v499 = vpop.f32.mrf.mxu0
    %v500 = vadd.f32 0.0, %v499
    %v501 = vpop.f32.mrf.mxu0
    %502 = vdwg.mxu0
    %v503 = vadd.f32 %v480, %v500
    %v504 = vxor.u32 %v503, 2147483648
    %v505 = vmul.f32 %v504, 1.442695
    %v506 = vpow.pop %v505
    %v507 = vadd.f32 %v506, 1.0
    %v508 = vrcp.pop %v507
    %v509 = vmul.f32 %v507, %v508
    %v510 = vsub.f32 1.0, %v509
    %v511 = vmul.f32 %v508, %v510
    %v512 = vadd.f32 %v508, %v511
    %vm513 = vweird.f32 %v507
    %vm514 = vweird.f32 %v508
    %vm515 = vmor %vm513, %vm514
    %v516 = vsel %vm515, %v508, %v512
    %v517 = vand.u32 2147483647, %v507
    %vm518 = vcmp.eq.f32.partialorder %v517, 8.507059e+37
    %v519 = vand.u32 %v507, 2147483648
    %v520 = vor.u32 1.1754944e-38, %v519
    %v521 = vsel %vm518, %v520, %v516
    %v522 = vmul.f32 1.0, %v521
    %v523 = vtanh.pop %v503
    %v524 = vmul.f32 %v522, %v446
    %526 = vrot.lane.b32.xlu0 %v523, 64
    %v527 = vpop.permute.xlu0 %526
    %v529 = vmul.f32 %v522, %v527
    %531 = vrot.lane.b32.xlu0 %v529, 32
    %v532 = vpop.permute.xlu0 %531
    %v534 = vadd.f32 %v524, %v532
    %v535 = vtanh.pop %v534
    %537 = vrot.lane.b32.xlu0 %v535, 64
    %v538 = vpop.permute.xlu0 %537
    %v540 = vmul.f32 %v522, %v538
    %v541 = vpack.c.bf16 %v540, %v540
    %v543 = vrot.slane %v541, 3
    %v546 = vsel %vm191, %v541, %v543
    %548 = vrot.lane.b32.xlu0 %v546, 32
    %v549 = vpop.permute.xlu0 %548
    %s551 = scalar_lea.vmem [#allocation10], 4
    %552 = vst.msk [vmem:[%s551] sm:$0x1] %vm199, %v549
    %s553 = scalar_lea.vmem [#allocation4], 5
    %v554 = vld [vmem:[%s553] sm:$0x1]
    %v556 = vsel %vm101, %v554, 0
    %558 = vmatpush.bf16.msra.mxu0 0
    %559 = vmatpush.bf16.msra.mxu0 0
    %560 = vmatpush.bf16.msra.mxu0 0
    %561 = vmatpush.bf16.msra.mxu0 0
    %562 = vmatpush.bf16.msra.mxu0 0
    %563 = vmatpush.bf16.msra.mxu0 0
    %564 = vmatpush.bf16.msra.mxu0 %v98
    %565 = vmatpush.bf16.msra.mxu0 %v97
    %566 = vmatmul.bf16.gmra.mxu0 %v556
    %v567 = vpop.f32.mrf.mxu0
    %v568 = vadd.f32 %v87, %v567
    %v569 = vpop.f32.mrf.mxu0
    %570 = vdwg.mxu0
    %v571 = vunpack.c.l.b16 %v541
    %v572 = vpack.c.b16 %v571, %v571
    %573 = vrot.lane.b32.xlu0 %v572, 32
    %v574 = vpop.permute.xlu0 %573
    %v576 = vsel %vm101, %v574, 0
    %578 = vmatpush.bf16.msra.mxu0 0
    %579 = vmatpush.bf16.msra.mxu0 0
    %580 = vmatpush.bf16.msra.mxu0 0
    %581 = vmatpush.bf16.msra.mxu0 0
    %582 = vmatpush.bf16.msra.mxu0 0
    %583 = vmatpush.bf16.msra.mxu0 0
    %584 = vmatpush.bf16.msra.mxu0 %v127
    %585 = vmatpush.bf16.msra.mxu0 %v126
    %586 = vmatmul.bf16.gmra.mxu0 %v576
    %v587 = vpop.f32.mrf.mxu0
    %v588 = vadd.f32 0.0, %v587
    %v589 = vpop.f32.mrf.mxu0
    %590 = vdwg.mxu0
    %v591 = vadd.f32 %v568, %v588
    %v592 = vxor.u32 %v591, 2147483648
    %v593 = vmul.f32 %v592, 1.442695
    %v594 = vpow.pop %v593
    %v595 = vadd.f32 %v594, 1.0
    %v596 = vrcp.pop %v595
    %v597 = vmul.f32 %v595, %v596
    %v598 = vsub.f32 1.0, %v597
    %v599 = vmul.f32 %v596, %v598
    %v600 = vadd.f32 %v596, %v599
    %vm601 = vweird.f32 %v595
    %vm602 = vweird.f32 %v596
    %vm603 = vmor %vm601, %vm602
    %v604 = vsel %vm603, %v596, %v600
    %v605 = vand.u32 2147483647, %v595
    %vm606 = vcmp.eq.f32.partialorder %v605, 8.507059e+37
    %v607 = vand.u32 %v595, 2147483648
    %v608 = vor.u32 1.1754944e-38, %v607
    %v609 = vsel %vm606, %v608, %v604
    %v610 = vmul.f32 1.0, %v609
    %v611 = vtanh.pop %v591
    %v612 = vmul.f32 %v610, %v534
    %614 = vrot.lane.b32.xlu0 %v611, 64
    %v615 = vpop.permute.xlu0 %614
    %v617 = vmul.f32 %v610, %v615
    %619 = vrot.lane.b32.xlu0 %v617, 32
    %v620 = vpop.permute.xlu0 %619
    %v622 = vadd.f32 %v612, %v620
    %v623 = vtanh.pop %v622
    %625 = vrot.lane.b32.xlu0 %v623, 64
    %v626 = vpop.permute.xlu0 %625
    %v628 = vmul.f32 %v610, %v626
    %v629 = vpack.c.bf16 %v628, %v628
    %v631 = vrot.slane %v629, 3
    %v634 = vsel %vm191, %v629, %v631
    %636 = vrot.lane.b32.xlu0 %v634, 32
    %v637 = vpop.permute.xlu0 %636
    %s639 = scalar_lea.vmem [#allocation10], 5
    %640 = vst.msk [vmem:[%s639] sm:$0x1] %vm199, %v637
    %s641 = scalar_lea.vmem [#allocation4], 6
    %v642 = vld [vmem:[%s641] sm:$0x1]
    %v644 = vsel %vm101, %v642, 0
    %646 = vmatpush.bf16.msra.mxu0 0
    %647 = vmatpush.bf16.msra.mxu0 0
    %648 = vmatpush.bf16.msra.mxu0 0
    %649 = vmatpush.bf16.msra.mxu0 0
    %650 = vmatpush.bf16.msra.mxu0 0
    %651 = vmatpush.bf16.msra.mxu0 0
    %652 = vmatpush.bf16.msra.mxu0 %v98
    %653 = vmatpush.bf16.msra.mxu0 %v97
    %654 = vmatmul.bf16.gmra.mxu0 %v644
    %v655 = vpop.f32.mrf.mxu0
    %v656 = vadd.f32 %v87, %v655
    %v657 = vpop.f32.mrf.mxu0
    %658 = vdwg.mxu0
    %v659 = vunpack.c.l.b16 %v629
    %v660 = vpack.c.b16 %v659, %v659
    %661 = vrot.lane.b32.xlu0 %v660, 32
    %v662 = vpop.permute.xlu0 %661
    %v664 = vsel %vm101, %v662, 0
    %666 = vmatpush.bf16.msra.mxu0 0
    %667 = vmatpush.bf16.msra.mxu0 0
    %668 = vmatpush.bf16.msra.mxu0 0
    %669 = vmatpush.bf16.msra.mxu0 0
    %670 = vmatpush.bf16.msra.mxu0 0
    %671 = vmatpush.bf16.msra.mxu0 0
    %672 = vmatpush.bf16.msra.mxu0 %v127
    %673 = vmatpush.bf16.msra.mxu0 %v126
    %674 = vmatmul.bf16.gmra.mxu0 %v664
    %v675 = vpop.f32.mrf.mxu0
    %v676 = vadd.f32 0.0, %v675
    %v677 = vpop.f32.mrf.mxu0
    %678 = vdwg.mxu0
    %v679 = vadd.f32 %v656, %v676
    %v680 = vxor.u32 %v679, 2147483648
    %v681 = vmul.f32 %v680, 1.442695
    %v682 = vpow.pop %v681
    %v683 = vadd.f32 %v682, 1.0
    %v684 = vrcp.pop %v683
    %v685 = vmul.f32 %v683, %v684
    %v686 = vsub.f32 1.0, %v685
    %v687 = vmul.f32 %v684, %v686
    %v688 = vadd.f32 %v684, %v687
    %vm689 = vweird.f32 %v683
    %vm690 = vweird.f32 %v684
    %vm691 = vmor %vm689, %vm690
    %v692 = vsel %vm691, %v684, %v688
    %v693 = vand.u32 2147483647, %v683
    %vm694 = vcmp.eq.f32.partialorder %v693, 8.507059e+37
    %v695 = vand.u32 %v683, 2147483648
    %v696 = vor.u32 1.1754944e-38, %v695
    %v697 = vsel %vm694, %v696, %v692
    %v698 = vmul.f32 1.0, %v697
    %v699 = vtanh.pop %v679
    %v700 = vmul.f32 %v698, %v622
    %702 = vrot.lane.b32.xlu0 %v699, 64
    %v703 = vpop.permute.xlu0 %702
    %v705 = vmul.f32 %v698, %v703
    %707 = vrot.lane.b32.xlu0 %v705, 32
    %v708 = vpop.permute.xlu0 %707
    %v710 = vadd.f32 %v700, %v708
    %v711 = vtanh.pop %v710
    %713 = vrot.lane.b32.xlu0 %v711, 64
    %v714 = vpop.permute.xlu0 %713
    %v716 = vmul.f32 %v698, %v714
    %v717 = vpack.c.bf16 %v716, %v716
    %v719 = vrot.slane %v717, 3
    %v722 = vsel %vm191, %v717, %v719
    %724 = vrot.lane.b32.xlu0 %v722, 32
    %v725 = vpop.permute.xlu0 %724
    %s727 = scalar_lea.vmem [#allocation10], 6
    %728 = vst.msk [vmem:[%s727] sm:$0x1] %vm199, %v725
    %s729 = scalar_lea.vmem [#allocation4], 7
    %v730 = vld [vmem:[%s729] sm:$0x1]
    %v732 = vsel %vm101, %v730, 0
    %734 = vmatpush.bf16.msra.mxu0 0
    %735 = vmatpush.bf16.msra.mxu0 0
    %736 = vmatpush.bf16.msra.mxu0 0
    %737 = vmatpush.bf16.msra.mxu0 0
    %738 = vmatpush.bf16.msra.mxu0 0
    %739 = vmatpush.bf16.msra.mxu0 0
    %740 = vmatpush.bf16.msra.mxu0 %v98
    %741 = vmatpush.bf16.msra.mxu0 %v97
    %742 = vmatmul.bf16.gmra.mxu0 %v732
    %v743 = vpop.f32.mrf.mxu0
    %v744 = vadd.f32 %v87, %v743
    %v745 = vpop.f32.mrf.mxu0
    %746 = vdwg.mxu0
    %v747 = vunpack.c.l.b16 %v717
    %v748 = vpack.c.b16 %v747, %v747
    %749 = vrot.lane.b32.xlu0 %v748, 32
    %v750 = vpop.permute.xlu0 %749
    %v752 = vsel %vm101, %v750, 0
    %754 = vmatpush.bf16.msra.mxu0 0
    %755 = vmatpush.bf16.msra.mxu0 0
    %756 = vmatpush.bf16.msra.mxu0 0
    %757 = vmatpush.bf16.msra.mxu0 0
    %758 = vmatpush.bf16.msra.mxu0 0
    %759 = vmatpush.bf16.msra.mxu0 0
    %760 = vmatpush.bf16.msra.mxu0 %v127
    %761 = vmatpush.bf16.msra.mxu0 %v126
    %762 = vmatmul.bf16.gmra.mxu0 %v752
    %v763 = vpop.f32.mrf.mxu0
    %v764 = vadd.f32 0.0, %v763
    %v765 = vpop.f32.mrf.mxu0
    %766 = vdwg.mxu0
    %v767 = vadd.f32 %v744, %v764
    %v768 = vxor.u32 %v767, 2147483648
    %v769 = vmul.f32 %v768, 1.442695
    %v770 = vpow.pop %v769
    %v771 = vadd.f32 %v770, 1.0
    %v772 = vrcp.pop %v771
    %v773 = vmul.f32 %v771, %v772
    %v774 = vsub.f32 1.0, %v773
    %v775 = vmul.f32 %v772, %v774
    %v776 = vadd.f32 %v772, %v775
    %vm777 = vweird.f32 %v771
    %vm778 = vweird.f32 %v772
    %vm779 = vmor %vm777, %vm778
    %v780 = vsel %vm779, %v772, %v776
    %v781 = vand.u32 2147483647, %v771
    %vm782 = vcmp.eq.f32.partialorder %v781, 8.507059e+37
    %v783 = vand.u32 %v771, 2147483648
    %v784 = vor.u32 1.1754944e-38, %v783
    %v785 = vsel %vm782, %v784, %v780
    %v786 = vmul.f32 1.0, %v785
    %v787 = vtanh.pop %v767
    %v788 = vmul.f32 %v786, %v710
    %790 = vrot.lane.b32.xlu0 %v787, 64
    %v791 = vpop.permute.xlu0 %790
    %v793 = vmul.f32 %v786, %v791
    %795 = vrot.lane.b32.xlu0 %v793, 32
    %v796 = vpop.permute.xlu0 %795
    %v798 = vadd.f32 %v788, %v796
    %v799 = vtanh.pop %v798
    %801 = vrot.lane.b32.xlu0 %v799, 64
    %v802 = vpop.permute.xlu0 %801
    %v804 = vmul.f32 %v786, %v802
    %v805 = vpack.c.bf16 %v804, %v804
    %v807 = vrot.slane %v805, 3
    %v810 = vsel %vm191, %v805, %v807
    %812 = vrot.lane.b32.xlu0 %v810, 32
    %v813 = vpop.permute.xlu0 %812
    %s815 = scalar_lea.vmem [#allocation10], 7
    %816 = vst.msk [vmem:[%s815] sm:$0x1] %vm199, %v813
    %817 = vst.msk [vmem:[#allocation2] sm:$0x1] %vm199, %v813
    %819 = vrot.lane.b32.xlu0 %v798, 96
    %v820 = vpop.permute.xlu0 %819
    %vm822 = vcmask 254976
    %823 = vst.msk [vmem:[#allocation3] sm:$0x3] %vm822, %v820
    // Predicated region
    $region34: #{tpu_custom_call.1} parent=1 // pred_check
      _
    $region35: #{tpu_custom_call.1} parent=1 // pred_check_branch
      %825 = sbr.rel (0) target = $region37
    $region36: #{tpu_custom_call.1} parent=1 // pred_region
      %827 = vsyncadd [#allocation6], 0
      %s828 = sshll.u32 [#allocation10], 4
      %s829 = int_to_ptr.vmem [resolvable:$true] %s828
      %s830 = sshll.u32 %s4, 4
      %s831 = int_to_ptr.hbm [resolvable:$true] %s830
      %836 = dma.vmem_to_hbm [thread:$0]  %s829, 128, %s831, [#allocation6], 16, 16, 1
    $region37: #{tpu_custom_call.1} parent=1 // pred_fallthru
      _
    // Predicated region
    $region38: #{tpu_custom_call.1} parent=1 // pred_check
      _
    $region39: #{tpu_custom_call.1} parent=1 // pred_check_branch
      %838 = sbr.rel (0) target = $region41
    $region40: #{tpu_custom_call.1} parent=1 // pred_region
      %840 = dma.done [#allocation6], 128
    $region41: #{tpu_custom_call.1} parent=1 // pred_fallthru
      _
    %841 = vsyncpa [#allocation5], 1
    %842 = vsyncpa [#allocation8], 1
    %843 = vsyncpa [#allocation6], 1

</llo_original>
